<compile_context>
chip_gen: v5e
topology: v5e:2x2
jax: 0.10.0
libtpu: 0.0.40
codegen_flags: <defaults>
</compile_context>

<pallas_src>
import functools
import math

import jax
import jax.numpy as jnp
from jax import lax
from jax.experimental import pallas as pl
from jax.experimental.pallas import tpu as pltpu


def _gaussian_taps(kernel_size, sigma):
    """1-D Gaussian taps, matching torchvision's _get_gaussian_kernel1d."""
    half = (kernel_size - 1) * 0.5
    xs = [-half + i for i in range(kernel_size)]
    taps = [math.exp(-0.5 * (x / sigma) ** 2) for x in xs]
    s = sum(taps)
    return tuple(v / s for v in taps)


def _weighted_bce_block(p_ref, t_ref, pad_ref, *, H, W, r0, rg, taps, alpha):
    """Element-wise distance-weighted BCE loss for one (PB, H, W) block of planes."""
    R = max(r0, rg)
    PB = p_ref.shape[0]
    fill = jnp.float32(-1e30)  # never wins the max: every window contains its centre

    p = p_ref[...].astype(jnp.float32)
    t = t_ref[...].astype(jnp.float32)
    inv = 1.0 - t

    # --- target_boundary = max_pool2d(1 - target, theta0, stride=1, pad=r0) - (1 - target)
    # Separable max (columns then rows); torch pads max_pool windows with -inf.
    if r0 > 0:
        # Re-fill only the halo frame used by the max-pool (scratch persists across
        # grid steps, so stale reflect-pad values from the blur must be cleared).
        pad_ref[:, R:R + H, R - r0:R] = jnp.full((PB, H, r0), fill, jnp.float32)
        pad_ref[:, R:R + H, R + W:R + W + r0] = jnp.full((PB, H, r0), fill, jnp.float32)
        pad_ref[:, R - r0:R, R:R + W] = jnp.full((PB, r0, W), fill, jnp.float32)
        pad_ref[:, R + H:R + H + r0, R:R + W] = jnp.full((PB, r0, W), fill, jnp.float32)
        pad_ref[:, R:R + H, R:R + W] = inv
        colmax = None
        for dx in range(-r0, r0 + 1):
            v = pad_ref[:, R:R + H, R + dx:R + dx + W]
            colmax = v if colmax is None else jnp.maximum(colmax, v)
        pad_ref[:, R:R + H, R:R + W] = colmax
        mp = None
        for dy in range(-r0, r0 + 1):
            v = pad_ref[:, R + dy:R + dy + H, R:R + W]
            mp = v if mp is None else jnp.maximum(mp, v)
        boundary = mp - inv
    else:
        boundary = jnp.zeros((PB, H, W), jnp.float32)

    # --- weights = GaussianBlur(theta)(boundary) + alpha (separable, reflect padding)
    # W pass
    pad_ref[:, R:R + H, R:R + W] = boundary
    for k in range(1, rg + 1):
        pad_ref[:, R:R + H, R - k:R - k + 1] = boundary[:, :, k:k + 1]
        pad_ref[:, R:R + H, R + W - 1 + k:R + W + k] = boundary[:, :, W - 1 - k:W - k]
    blur_w = jnp.zeros((PB, H, W), jnp.float32)
    for i, w in enumerate(taps):
        d = i - rg
        blur_w = blur_w + jnp.float32(w) * pad_ref[:, R:R + H, R + d:R + d + W]
    # H pass
    pad_ref[:, R:R + H, R:R + W] = blur_w
    for k in range(1, rg + 1):
        pad_ref[:, R - k:R - k + 1, R:R + W] = blur_w[:, k:k + 1, :]
        pad_ref[:, R + H - 1 + k:R + H + k, R:R + W] = blur_w[:, H - 1 - k:H - k, :]
    blurred = jnp.zeros((PB, H, W), jnp.float32)
    for i, w in enumerate(taps):
        d = i - rg
        blurred = blurred + jnp.float32(w) * pad_ref[:, R + d:R + d + H, R:R + W]
    weights = blurred + jnp.float32(alpha)

    # --- BCE(predict, target), reduction='none' (logs clamped at -100 like torch)
    log_p = jnp.maximum(jnp.log(p), -100.0)
    log_1mp = jnp.maximum(jnp.log(1.0 - p), -100.0)
    bce = -(t * log_p + (1.0 - t) * log_1mp)

    return bce * weights


def _sum_kernel(p_ref, t_ref, out_ref, pad_ref, *, H, W, r0, rg, taps, alpha,
                planes_per_block, last_block_planes):
    loss = _weighted_bce_block(p_ref, t_ref, pad_ref, H=H, W=W, r0=r0, rg=rg,
                               taps=taps, alpha=alpha)
    full = jnp.sum(loss)
    if last_block_planes == planes_per_block:
        s = full
    else:
        # Final (partial) block: only the first `last_block_planes` planes are valid.
        tail = jnp.sum(loss[:last_block_planes])
        s = jnp.where(pl.program_id(0) == pl.num_programs(0) - 1, tail, full)
    out_ref[...] = jnp.reshape(s, (1, 1, 1))


def _elem_kernel(p_ref, t_ref, out_ref, pad_ref, *, H, W, r0, rg, taps, alpha):
    out_ref[...] = _weighted_bce_block(
        p_ref, t_ref, pad_ref, H=H, W=W, r0=r0, rg=rg, taps=taps, alpha=alpha
    ).astype(out_ref.dtype)


def distance_weight_bce_loss(predict, target, *, alpha=1.0, theta0=3, theta=9,
                             sigma=1.7, reduction="mean", block_bytes=2 << 20):
    """Pallas implementation of DistanceWeightBCELoss.forward.

    predict: probabilities in (0, 1), shape [B, C, H, W]; target: same shape, in [0, 1].
    """
    # TODO(synk): torchvision's T.GaussianBlur samples sigma ~ U(0.1, 2.0) per call;
    # a fixed deterministic sigma (default 1.7) is used here instead.
    assert predict.shape[0] == target.shape[0], "batch sizes don't match"
    assert predict.shape == target.shape and predict.ndim == 4
    assert theta0 % 2 == 1 and theta % 2 == 1, "kernel sizes must be odd"
    B, C, H, W = predict.shape
    r0 = (theta0 - 1) // 2
    rg = theta // 2
    assert H > rg and W > rg, "reflect padding needs spatial dims larger than theta // 2"
    # TODO(synk): planes larger than a few MiB (huge H*W) would need spatial halo
    # tiling; the current kernel keeps whole H x W planes resident in VMEM.

    taps = _gaussian_taps(theta, sigma)
    n_planes = B * C
    p = predict.reshape(n_planes, H, W)   # free view, no HBM copy
    t = target.reshape(n_planes, H, W)

    plane_bytes = H * W * 4
    pb = int(max(1, min(n_planes, block_bytes // plane_bytes)))
    grid_n = -(-n_planes // pb)
    last = n_planes - (grid_n - 1) * pb
    R = max(r0, rg)

    in_specs = [
        pl.BlockSpec((pb, H, W), lambda j: (j, 0, 0)),
        pl.BlockSpec((pb, H, W), lambda j: (j, 0, 0)),
    ]
    scratch_shapes = [pltpu.VMEM((pb, H + 2 * R, W + 2 * R), jnp.float32)]
    compiler_params = pltpu.CompilerParams(
        dimension_semantics=("parallel",),
        vmem_limit_bytes=48 * 1024 * 1024,
    )
    common = dict(H=H, W=W, r0=r0, rg=rg, taps=taps, alpha=float(alpha))

    if reduction in ("mean", "sum"):
        partials = pl.pallas_call(
            functools.partial(_sum_kernel, planes_per_block=pb,
                              last_block_planes=last, **common),
            out_shape=jax.ShapeDtypeStruct((grid_n, 1, 1), jnp.float32),
            grid_spec=pltpu.PrefetchScalarGridSpec(
                num_scalar_prefetch=0,
                grid=(grid_n,),
                in_specs=in_specs,
                out_specs=pl.BlockSpec((1, 1, 1), lambda j: (j, 0, 0)),
                scratch_shapes=scratch_shapes,
            ),
            compiler_params=compiler_params,
        )(p, t)
        total = jnp.sum(partials)
        if reduction == "mean":
            return total / float(n_planes * H * W)
        return total

    loss = pl.pallas_call(
        functools.partial(_elem_kernel, **common),
        out_shape=jax.ShapeDtypeStruct((n_planes, H, W), jnp.float32),
        grid_spec=pltpu.PrefetchScalarGridSpec(
            num_scalar_prefetch=0,
            grid=(grid_n,),
            in_specs=in_specs,
            out_specs=pl.BlockSpec((pb, H, W), lambda j: (j, 0, 0)),
            scratch_shapes=scratch_shapes,
        ),
        compiler_params=compiler_params,
    )(p, t)
    return loss.reshape(B, C * H * W)


def _reference(predict, target, *, alpha=1.0, theta0=3, theta=9, sigma=1.7,
               reduction="mean"):
    """Pure-JAX (XLA) reference of DistanceWeightBCELoss.forward."""
    B, C, H, W = predict.shape
    p = predict.astype(jnp.float32)
    t = target.astype(jnp.float32)
    inv = 1.0 - t
    r0 = (theta0 - 1) // 2
    rg = theta // 2

    mp = lax.reduce_window(inv, -jnp.inf, lax.max,
                           window_dimensions=(1, 1, theta0, theta0),
                           window_strides=(1, 1, 1, 1),
                           padding=((0, 0), (0, 0), (r0, r0), (r0, r0)))
    boundary = mp - inv

    taps = jnp.asarray(_gaussian_taps(theta, sigma), jnp.float32)
    k2d = jnp.outer(taps, taps)[None, None, :, :]
    xp = jnp.pad(boundary, ((0, 0), (0, 0), (rg, rg), (rg, rg)), mode="reflect")
    blurred = lax.conv_general_dilated(
        xp.reshape(B * C, 1, H + 2 * rg, W + 2 * rg), k2d,
        window_strides=(1, 1), padding="VALID",
        dimension_numbers=("NCHW", "OIHW", "NCHW"),
        precision=lax.Precision.HIGHEST).reshape(B, C, H, W)
    weights = blurred + alpha

    log_p = jnp.maximum(jnp.log(p), -100.0)
    log_1mp = jnp.maximum(jnp.log(1.0 - p), -100.0)
    bce = -(t * log_p + (1.0 - t) * log_1mp)

    loss = (bce * weights).reshape(B, -1)
    if reduction == "mean":
        return loss.mean()
    if reduction == "sum":
        return loss.sum()
    return loss


if __name__ == "__main__":
    key = jax.random.PRNGKey(0)
    k1, k2 = jax.random.split(key)
    B, C, H, W = 2, 4, 16, 16
    # predict must be probabilities: the module uses nn.BCELoss (not BCEWithLogits).
    predict = jax.nn.sigmoid(jax.random.normal(k1, (B, C, H, W), dtype=jnp.float32))
    target = (jax.random.uniform(k2, (B, C, H, W)) > 0.5).astype(jnp.float32)

    out_mean = distance_weight_bce_loss(predict, target, reduction="mean")
    out_mean = jax.block_until_ready(out_mean)
    ref_mean = _reference(predict, target, reduction="mean")
    assert jnp.allclose(out_mean, ref_mean, rtol=1e-4, atol=1e-5), (out_mean, ref_mean)

    out_none = distance_weight_bce_loss(predict, target, reduction="none")
    out_none = jax.block_until_ready(out_none)
    ref_none = _reference(predict, target, reduction="none")
    assert out_none.shape == (B, C * H * W)
    assert jnp.allclose(out_none, ref_none, rtol=1e-4, atol=1e-5), (
        float(jnp.max(jnp.abs(out_none - ref_none))))

    print("KERNEL_OK")
</pallas_src>

<mosaic_0001>
module attributes {stable_mosaic.version = 11 : i64} {
  func.func @_sum_kernel(%arg0: i32, %arg1: memref<8x16x16xf32, #tpu.memory_space<vmem>>, %arg2: memref<8x16x16xf32, #tpu.memory_space<vmem>>, %arg3: memref<1x1x1xf32, #tpu.memory_space<vmem>>, %arg4: memref<8x24x24xf32, #tpu.memory_space<vmem>>) attributes {dimension_semantics = [#tpu.dimension_semantics<parallel>], iteration_bounds = array<i64: 1>, scalar_prefetch = 0 : i64, scratch_operands = 1 : i64, tpu.core_type = #tpu.core_type<tc>, window_params = [{transform_indices = @transform_0, window_bounds = array<i64: 8, 16, 16>}, {transform_indices = @transform_1, window_bounds = array<i64: 8, 16, 16>}, {transform_indices = @transform_2, window_bounds = array<i64: 1, 1, 1>}]} {
    %c0 = arith.constant 0 : index
    %c0_0 = arith.constant 0 : index
    %c0_1 = arith.constant 0 : index
    %0 = vector.load %arg1[%c0, %c0_0, %c0_1] : memref<8x16x16xf32, #tpu.memory_space<vmem>>, vector<8x16x16xf32>
    %c0_2 = arith.constant 0 : index
    %c0_3 = arith.constant 0 : index
    %c0_4 = arith.constant 0 : index
    %1 = vector.load %arg2[%c0_2, %c0_3, %c0_4] : memref<8x16x16xf32, #tpu.memory_space<vmem>>, vector<8x16x16xf32>
    %cst = arith.constant 1.000000e+00 : f32
    %2 = vector.broadcast %cst : f32 to vector<8x16x16xf32>
    %3 = arith.subf %2, %1 : vector<8x16x16xf32>
    %cst_5 = arith.constant -1.000000e+30 : f32
    %4 = vector.broadcast %cst_5 : f32 to vector<8x16x1xf32>
    %c0_6 = arith.constant 0 : index
    %c4 = arith.constant 4 : index
    %c3 = arith.constant 3 : index
    %5 = vector.load %arg4[%c0_6, %c4, %c3] : memref<8x24x24xf32, #tpu.memory_space<vmem>>, vector<8x16x1xf32>
    tpu.vector_store %arg4[%c0_6, %c4, %c3], %4 {strides = array<i32>} : memref<8x24x24xf32, #tpu.memory_space<vmem>>, vector<8x16x1xf32>,
    %cst_7 = arith.constant -1.000000e+30 : f32
    %6 = vector.broadcast %cst_7 : f32 to vector<8x16x1xf32>
    %c0_8 = arith.constant 0 : index
    %c4_9 = arith.constant 4 : index
    %c20 = arith.constant 20 : index
    %7 = vector.load %arg4[%c0_8, %c4_9, %c20] : memref<8x24x24xf32, #tpu.memory_space<vmem>>, vector<8x16x1xf32>
    tpu.vector_store %arg4[%c0_8, %c4_9, %c20], %6 {strides = array<i32>} : memref<8x24x24xf32, #tpu.memory_space<vmem>>, vector<8x16x1xf32>,
    %cst_10 = arith.constant -1.000000e+30 : f32
    %8 = vector.broadcast %cst_10 : f32 to vector<8x1x16xf32>
    %c0_11 = arith.constant 0 : index
    %c3_12 = arith.constant 3 : index
    %c4_13 = arith.constant 4 : index
    %9 = vector.load %arg4[%c0_11, %c3_12, %c4_13] : memref<8x24x24xf32, #tpu.memory_space<vmem>>, vector<8x1x16xf32>
    tpu.vector_store %arg4[%c0_11, %c3_12, %c4_13], %8 {strides = array<i32>} : memref<8x24x24xf32, #tpu.memory_space<vmem>>, vector<8x1x16xf32>,
    %cst_14 = arith.constant -1.000000e+30 : f32
    %10 = vector.broadcast %cst_14 : f32 to vector<8x1x16xf32>
    %c0_15 = arith.constant 0 : index
    %c20_16 = arith.constant 20 : index
    %c4_17 = arith.constant 4 : index
    %11 = vector.load %arg4[%c0_15, %c20_16, %c4_17] : memref<8x24x24xf32, #tpu.memory_space<vmem>>, vector<8x1x16xf32>
    tpu.vector_store %arg4[%c0_15, %c20_16, %c4_17], %10 {strides = array<i32>} : memref<8x24x24xf32, #tpu.memory_space<vmem>>, vector<8x1x16xf32>,
    %c0_18 = arith.constant 0 : index
    %c4_19 = arith.constant 4 : index
    %c4_20 = arith.constant 4 : index
    %12 = vector.load %arg4[%c0_18, %c4_19, %c4_20] : memref<8x24x24xf32, #tpu.memory_space<vmem>>, vector<8x16x16xf32>
    tpu.vector_store %arg4[%c0_18, %c4_19, %c4_20], %3 {strides = array<i32>} : memref<8x24x24xf32, #tpu.memory_space<vmem>>, vector<8x16x16xf32>,
    %c0_21 = arith.constant 0 : index
    %c4_22 = arith.constant 4 : index
    %c3_23 = arith.constant 3 : index
    %13 = vector.load %arg4[%c0_21, %c4_22, %c3_23] : memref<8x24x24xf32, #tpu.memory_space<vmem>>, vector<8x16x16xf32>
    %c0_24 = arith.constant 0 : index
    %c4_25 = arith.constant 4 : index
    %c4_26 = arith.constant 4 : index
    %14 = vector.load %arg4[%c0_24, %c4_25, %c4_26] : memref<8x24x24xf32, #tpu.memory_space<vmem>>, vector<8x16x16xf32>
    %15 = arith.maximumf %13, %14 : vector<8x16x16xf32>
    %c0_27 = arith.constant 0 : index
    %c4_28 = arith.constant 4 : index
    %c5 = arith.constant 5 : index
    %16 = vector.load %arg4[%c0_27, %c4_28, %c5] : memref<8x24x24xf32, #tpu.memory_space<vmem>>, vector<8x16x16xf32>
    %17 = arith.maximumf %15, %16 : vector<8x16x16xf32>
    %c0_29 = arith.constant 0 : index
    %c4_30 = arith.constant 4 : index
    %c4_31 = arith.constant 4 : index
    %18 = vector.load %arg4[%c0_29, %c4_30, %c4_31] : memref<8x24x24xf32, #tpu.memory_space<vmem>>, vector<8x16x16xf32>
    tpu.vector_store %arg4[%c0_29, %c4_30, %c4_31], %17 {strides = array<i32>} : memref<8x24x24xf32, #tpu.memory_space<vmem>>, vector<8x16x16xf32>,
    %c0_32 = arith.constant 0 : index
    %c3_33 = arith.constant 3 : index
    %c4_34 = arith.constant 4 : index
    %19 = vector.load %arg4[%c0_32, %c3_33, %c4_34] : memref<8x24x24xf32, #tpu.memory_space<vmem>>, vector<8x16x16xf32>
    %c0_35 = arith.constant 0 : index
    %c4_36 = arith.constant 4 : index
    %c4_37 = arith.constant 4 : index
    %20 = vector.load %arg4[%c0_35, %c4_36, %c4_37] : memref<8x24x24xf32, #tpu.memory_space<vmem>>, vector<8x16x16xf32>
    %21 = arith.maximumf %19, %20 : vector<8x16x16xf32>
    %c0_38 = arith.constant 0 : index
    %c5_39 = arith.constant 5 : index
    %c4_40 = arith.constant 4 : index
    %22 = vector.load %arg4[%c0_38, %c5_39, %c4_40] : memref<8x24x24xf32, #tpu.memory_space<vmem>>, vector<8x16x16xf32>
    %23 = arith.maximumf %21, %22 : vector<8x16x16xf32>
    %24 = arith.subf %23, %3 : vector<8x16x16xf32>
    %c0_41 = arith.constant 0 : index
    %c4_42 = arith.constant 4 : index
    %c4_43 = arith.constant 4 : index
    %25 = vector.load %arg4[%c0_41, %c4_42, %c4_43] : memref<8x24x24xf32, #tpu.memory_space<vmem>>, vector<8x16x16xf32>
    tpu.vector_store %arg4[%c0_41, %c4_42, %c4_43], %24 {strides = array<i32>} : memref<8x24x24xf32, #tpu.memory_space<vmem>>, vector<8x16x16xf32>,
    %26 = vector.extract_strided_slice %24 {offsets = [0, 0, 1], sizes = [8, 16, 1], strides = [1, 1, 1]} : vector<8x16x16xf32> to vector<8x16x1xf32>
    %c0_44 = arith.constant 0 : index
    %c4_45 = arith.constant 4 : index
    %c3_46 = arith.constant 3 : index
    %27 = vector.load %arg4[%c0_44, %c4_45, %c3_46] : memref<8x24x24xf32, #tpu.memory_space<vmem>>, vector<8x16x1xf32>
    tpu.vector_store %arg4[%c0_44, %c4_45, %c3_46], %26 {strides = array<i32>} : memref<8x24x24xf32, #tpu.memory_space<vmem>>, vector<8x16x1xf32>,
    %28 = vector.extract_strided_slice %24 {offsets = [0, 0, 14], sizes = [8, 16, 1], strides = [1, 1, 1]} : vector<8x16x16xf32> to vector<8x16x1xf32>
    %c0_47 = arith.constant 0 : index
    %c4_48 = arith.constant 4 : index
    %c20_49 = arith.constant 20 : index
    %29 = vector.load %arg4[%c0_47, %c4_48, %c20_49] : memref<8x24x24xf32, #tpu.memory_space<vmem>>, vector<8x16x1xf32>
    tpu.vector_store %arg4[%c0_47, %c4_48, %c20_49], %28 {strides = array<i32>} : memref<8x24x24xf32, #tpu.memory_space<vmem>>, vector<8x16x1xf32>,
    %30 = vector.extract_strided_slice %24 {offsets = [0, 0, 2], sizes = [8, 16, 1], strides = [1, 1, 1]} : vector<8x16x16xf32> to vector<8x16x1xf32>
    %c0_50 = arith.constant 0 : index
    %c4_51 = arith.constant 4 : index
    %c2 = arith.constant 2 : index
    %31 = vector.load %arg4[%c0_50, %c4_51, %c2] : memref<8x24x24xf32, #tpu.memory_space<vmem>>, vector<8x16x1xf32>
    tpu.vector_store %arg4[%c0_50, %c4_51, %c2], %30 {strides = array<i32>} : memref<8x24x24xf32, #tpu.memory_space<vmem>>, vector<8x16x1xf32>,
    %32 = vector.extract_strided_slice %24 {offsets = [0, 0, 13], sizes = [8, 16, 1], strides = [1, 1, 1]} : vector<8x16x16xf32> to vector<8x16x1xf32>
    %c0_52 = arith.constant 0 : index
    %c4_53 = arith.constant 4 : index
    %c21 = arith.constant 21 : index
    %33 = vector.load %arg4[%c0_52, %c4_53, %c21] : memref<8x24x24xf32, #tpu.memory_space<vmem>>, vector<8x16x1xf32>
    tpu.vector_store %arg4[%c0_52, %c4_53, %c21], %32 {strides = array<i32>} : memref<8x24x24xf32, #tpu.memory_space<vmem>>, vector<8x16x1xf32>,
    %34 = vector.extract_strided_slice %24 {offsets = [0, 0, 3], sizes = [8, 16, 1], strides = [1, 1, 1]} : vector<8x16x16xf32> to vector<8x16x1xf32>
    %c0_54 = arith.constant 0 : index
    %c4_55 = arith.constant 4 : index
    %c1 = arith.constant 1 : index
    %35 = vector.load %arg4[%c0_54, %c4_55, %c1] : memref<8x24x24xf32, #tpu.memory_space<vmem>>, vector<8x16x1xf32>
    tpu.vector_store %arg4[%c0_54, %c4_55, %c1], %34 {strides = array<i32>} : memref<8x24x24xf32, #tpu.memory_space<vmem>>, vector<8x16x1xf32>,
    %36 = vector.extract_strided_slice %24 {offsets = [0, 0, 12], sizes = [8, 16, 1], strides = [1, 1, 1]} : vector<8x16x16xf32> to vector<8x16x1xf32>
    %c0_56 = arith.constant 0 : index
    %c4_57 = arith.constant 4 : index
    %c22 = arith.constant 22 : index
    %37 = vector.load %arg4[%c0_56, %c4_57, %c22] : memref<8x24x24xf32, #tpu.memory_space<vmem>>, vector<8x16x1xf32>
    tpu.vector_store %arg4[%c0_56, %c4_57, %c22], %36 {strides = array<i32>} : memref<8x24x24xf32, #tpu.memory_space<vmem>>, vector<8x16x1xf32>,
    %38 = vector.extract_strided_slice %24 {offsets = [0, 0, 4], sizes = [8, 16, 1], strides = [1, 1, 1]} : vector<8x16x16xf32> to vector<8x16x1xf32>
    %c0_58 = arith.constant 0 : index
    %c4_59 = arith.constant 4 : index
    %c0_60 = arith.constant 0 : index
    %39 = vector.load %arg4[%c0_58, %c4_59, %c0_60] : memref<8x24x24xf32, #tpu.memory_space<vmem>>, vector<8x16x1xf32>
    tpu.vector_store %arg4[%c0_58, %c4_59, %c0_60], %38 {strides = array<i32>} : memref<8x24x24xf32, #tpu.memory_space<vmem>>, vector<8x16x1xf32>,
    %40 = vector.extract_strided_slice %24 {offsets = [0, 0, 11], sizes = [8, 16, 1], strides = [1, 1, 1]} : vector<8x16x16xf32> to vector<8x16x1xf32>
    %c0_61 = arith.constant 0 : index
    %c4_62 = arith.constant 4 : index
    %c23 = arith.constant 23 : index
    %41 = vector.load %arg4[%c0_61, %c4_62, %c23] : memref<8x24x24xf32, #tpu.memory_space<vmem>>, vector<8x16x1xf32>
    tpu.vector_store %arg4[%c0_61, %c4_62, %c23], %40 {strides = array<i32>} : memref<8x24x24xf32, #tpu.memory_space<vmem>>, vector<8x16x1xf32>,
    %cst_63 = arith.constant 0.000000e+00 : f32
    %42 = vector.broadcast %cst_63 : f32 to vector<8x16x16xf32>
    %c0_64 = arith.constant 0 : index
    %c4_65 = arith.constant 4 : index
    %c0_66 = arith.constant 0 : index
    %43 = vector.load %arg4[%c0_64, %c4_65, %c0_66] : memref<8x24x24xf32, #tpu.memory_space<vmem>>, vector<8x16x16xf32>
    %cst_67 = arith.constant 0.0148394536 : f32
    %44 = vector.broadcast %cst_67 : f32 to vector<8x16x16xf32>
    %45 = arith.mulf %44, %43 : vector<8x16x16xf32>
    %46 = arith.addf %42, %45 : vector<8x16x16xf32>
    %c0_68 = arith.constant 0 : index
    %c4_69 = arith.constant 4 : index
    %c1_70 = arith.constant 1 : index
    %47 = vector.load %arg4[%c0_68, %c4_69, %c1_70] : memref<8x24x24xf32, #tpu.memory_space<vmem>>, vector<8x16x16xf32>
    %cst_71 = arith.constant 0.0498172902 : f32
    %48 = vector.broadcast %cst_71 : f32 to vector<8x16x16xf32>
    %49 = arith.mulf %48, %47 : vector<8x16x16xf32>
    %50 = arith.addf %46, %49 : vector<8x16x16xf32>
    %c0_72 = arith.constant 0 : index
    %c4_73 = arith.constant 4 : index
    %c2_74 = arith.constant 2 : index
    %51 = vector.load %arg4[%c0_72, %c4_73, %c2_74] : memref<8x24x24xf32, #tpu.memory_space<vmem>>, vector<8x16x16xf32>
    %cst_75 = arith.constant 0.118322507 : f32
    %52 = vector.broadcast %cst_75 : f32 to vector<8x16x16xf32>
    %53 = arith.mulf %52, %51 : vector<8x16x16xf32>
    %54 = arith.addf %50, %53 : vector<8x16x16xf32>
    %c0_76 = arith.constant 0 : index
    %c4_77 = arith.constant 4 : index
    %c3_78 = arith.constant 3 : index
    %55 = vector.load %arg4[%c0_76, %c4_77, %c3_78] : memref<8x24x24xf32, #tpu.memory_space<vmem>>, vector<8x16x16xf32>
    %cst_79 = arith.constant 1.988290e-01 : f32
    %56 = vector.broadcast %cst_79 : f32 to vector<8x16x16xf32>
    %57 = arith.mulf %56, %55 : vector<8x16x16xf32>
    %58 = arith.addf %54, %57 : vector<8x16x16xf32>
    %c0_80 = arith.constant 0 : index
    %c4_81 = arith.constant 4 : index
    %c4_82 = arith.constant 4 : index
    %59 = vector.load %arg4[%c0_80, %c4_81, %c4_82] : memref<8x24x24xf32, #tpu.memory_space<vmem>>, vector<8x16x16xf32>
    %cst_83 = arith.constant 0.236383513 : f32
    %60 = vector.broadcast %cst_83 : f32 to vector<8x16x16xf32>
    %61 = arith.mulf %60, %59 : vector<8x16x16xf32>
    %62 = arith.addf %58, %61 : vector<8x16x16xf32>
    %c0_84 = arith.constant 0 : index
    %c4_85 = arith.constant 4 : index
    %c5_86 = arith.constant 5 : index
    %63 = vector.load %arg4[%c0_84, %c4_85, %c5_86] : memref<8x24x24xf32, #tpu.memory_space<vmem>>, vector<8x16x16xf32>
    %cst_87 = arith.constant 1.988290e-01 : f32
    %64 = vector.broadcast %cst_87 : f32 to vector<8x16x16xf32>
    %65 = arith.mulf %64, %63 : vector<8x16x16xf32>
    %66 = arith.addf %62, %65 : vector<8x16x16xf32>
    %c0_88 = arith.constant 0 : index
    %c4_89 = arith.constant 4 : index
    %c6 = arith.constant 6 : index
    %67 = vector.load %arg4[%c0_88, %c4_89, %c6] : memref<8x24x24xf32, #tpu.memory_space<vmem>>, vector<8x16x16xf32>
    %cst_90 = arith.constant 0.118322507 : f32
    %68 = vector.broadcast %cst_90 : f32 to vector<8x16x16xf32>
    %69 = arith.mulf %68, %67 : vector<8x16x16xf32>
    %70 = arith.addf %66, %69 : vector<8x16x16xf32>
    %c0_91 = arith.constant 0 : index
    %c4_92 = arith.constant 4 : index
    %c7 = arith.constant 7 : index
    %71 = vector.load %arg4[%c0_91, %c4_92, %c7] : memref<8x24x24xf32, #tpu.memory_space<vmem>>, vector<8x16x16xf32>
    %cst_93 = arith.constant 0.0498172902 : f32
    %72 = vector.broadcast %cst_93 : f32 to vector<8x16x16xf32>
    %73 = arith.mulf %72, %71 : vector<8x16x16xf32>
    %74 = arith.addf %70, %73 : vector<8x16x16xf32>
    %c0_94 = arith.constant 0 : index
    %c4_95 = arith.constant 4 : index
    %c8 = arith.constant 8 : index
    %75 = vector.load %arg4[%c0_94, %c4_95, %c8] : memref<8x24x24xf32, #tpu.memory_space<vmem>>, vector<8x16x16xf32>
    %cst_96 = arith.constant 0.0148394536 : f32
    %76 = vector.broadcast %cst_96 : f32 to vector<8x16x16xf32>
    %77 = arith.mulf %76, %75 : vector<8x16x16xf32>
    %78 = arith.addf %74, %77 : vector<8x16x16xf32>
    %c0_97 = arith.constant 0 : index
    %c4_98 = arith.constant 4 : index
    %c4_99 = arith.constant 4 : index
    %79 = vector.load %arg4[%c0_97, %c4_98, %c4_99] : memref<8x24x24xf32, #tpu.memory_space<vmem>>, vector<8x16x16xf32>
    tpu.vector_store %arg4[%c0_97, %c4_98, %c4_99], %78 {strides = array<i32>} : memref<8x24x24xf32, #tpu.memory_space<vmem>>, vector<8x16x16xf32>,
    %80 = vector.extract_strided_slice %78 {offsets = [0, 1, 0], sizes = [8, 1, 16], strides = [1, 1, 1]} : vector<8x16x16xf32> to vector<8x1x16xf32>
    %c0_100 = arith.constant 0 : index
    %c3_101 = arith.constant 3 : index
    %c4_102 = arith.constant 4 : index
    %81 = vector.load %arg4[%c0_100, %c3_101, %c4_102] : memref<8x24x24xf32, #tpu.memory_space<vmem>>, vector<8x1x16xf32>
    tpu.vector_store %arg4[%c0_100, %c3_101, %c4_102], %80 {strides = array<i32>} : memref<8x24x24xf32, #tpu.memory_space<vmem>>, vector<8x1x16xf32>,
    %82 = vector.extract_strided_slice %78 {offsets = [0, 14, 0], sizes = [8, 1, 16], strides = [1, 1, 1]} : vector<8x16x16xf32> to vector<8x1x16xf32>
    %c0_103 = arith.constant 0 : index
    %c20_104 = arith.constant 20 : index
    %c4_105 = arith.constant 4 : index
    %83 = vector.load %arg4[%c0_103, %c20_104, %c4_105] : memref<8x24x24xf32, #tpu.memory_space<vmem>>, vector<8x1x16xf32>
    tpu.vector_store %arg4[%c0_103, %c20_104, %c4_105], %82 {strides = array<i32>} : memref<8x24x24xf32, #tpu.memory_space<vmem>>, vector<8x1x16xf32>,
    %84 = vector.extract_strided_slice %78 {offsets = [0, 2, 0], sizes = [8, 1, 16], strides = [1, 1, 1]} : vector<8x16x16xf32> to vector<8x1x16xf32>
    %c0_106 = arith.constant 0 : index
    %c2_107 = arith.constant 2 : index
    %c4_108 = arith.constant 4 : index
    %85 = vector.load %arg4[%c0_106, %c2_107, %c4_108] : memref<8x24x24xf32, #tpu.memory_space<vmem>>, vector<8x1x16xf32>
    tpu.vector_store %arg4[%c0_106, %c2_107, %c4_108], %84 {strides = array<i32>} : memref<8x24x24xf32, #tpu.memory_space<vmem>>, vector<8x1x16xf32>,
    %86 = vector.extract_strided_slice %78 {offsets = [0, 13, 0], sizes = [8, 1, 16], strides = [1, 1, 1]} : vector<8x16x16xf32> to vector<8x1x16xf32>
    %c0_109 = arith.constant 0 : index
    %c21_110 = arith.constant 21 : index
    %c4_111 = arith.constant 4 : index
    %87 = vector.load %arg4[%c0_109, %c21_110, %c4_111] : memref<8x24x24xf32, #tpu.memory_space<vmem>>, vector<8x1x16xf32>
    tpu.vector_store %arg4[%c0_109, %c21_110, %c4_111], %86 {strides = array<i32>} : memref<8x24x24xf32, #tpu.memory_space<vmem>>, vector<8x1x16xf32>,
    %88 = vector.extract_strided_slice %78 {offsets = [0, 3, 0], sizes = [8, 1, 16], strides = [1, 1, 1]} : vector<8x16x16xf32> to vector<8x1x16xf32>
    %c0_112 = arith.constant 0 : index
    %c1_113 = arith.constant 1 : index
    %c4_114 = arith.constant 4 : index
    %89 = vector.load %arg4[%c0_112, %c1_113, %c4_114] : memref<8x24x24xf32, #tpu.memory_space<vmem>>, vector<8x1x16xf32>
    tpu.vector_store %arg4[%c0_112, %c1_113, %c4_114], %88 {strides = array<i32>} : memref<8x24x24xf32, #tpu.memory_space<vmem>>, vector<8x1x16xf32>,
    %90 = vector.extract_strided_slice %78 {offsets = [0, 12, 0], sizes = [8, 1, 16], strides = [1, 1, 1]} : vector<8x16x16xf32> to vector<8x1x16xf32>
    %c0_115 = arith.constant 0 : index
    %c22_116 = arith.constant 22 : index
    %c4_117 = arith.constant 4 : index
    %91 = vector.load %arg4[%c0_115, %c22_116, %c4_117] : memref<8x24x24xf32, #tpu.memory_space<vmem>>, vector<8x1x16xf32>
    tpu.vector_store %arg4[%c0_115, %c22_116, %c4_117], %90 {strides = array<i32>} : memref<8x24x24xf32, #tpu.memory_space<vmem>>, vector<8x1x16xf32>,
    %92 = vector.extract_strided_slice %78 {offsets = [0, 4, 0], sizes = [8, 1, 16], strides = [1, 1, 1]} : vector<8x16x16xf32> to vector<8x1x16xf32>
    %c0_118 = arith.constant 0 : index
    %c0_119 = arith.constant 0 : index
    %c4_120 = arith.constant 4 : index
    %93 = vector.load %arg4[%c0_118, %c0_119, %c4_120] : memref<8x24x24xf32, #tpu.memory_space<vmem>>, vector<8x1x16xf32>
    tpu.vector_store %arg4[%c0_118, %c0_119, %c4_120], %92 {strides = array<i32>} : memref<8x24x24xf32, #tpu.memory_space<vmem>>, vector<8x1x16xf32>,
    %94 = vector.extract_strided_slice %78 {offsets = [0, 11, 0], sizes = [8, 1, 16], strides = [1, 1, 1]} : vector<8x16x16xf32> to vector<8x1x16xf32>
    %c0_121 = arith.constant 0 : index
    %c23_122 = arith.constant 23 : index
    %c4_123 = arith.constant 4 : index
    %95 = vector.load %arg4[%c0_121, %c23_122, %c4_123] : memref<8x24x24xf32, #tpu.memory_space<vmem>>, vector<8x1x16xf32>
    tpu.vector_store %arg4[%c0_121, %c23_122, %c4_123], %94 {strides = array<i32>} : memref<8x24x24xf32, #tpu.memory_space<vmem>>, vector<8x1x16xf32>,
    %cst_124 = arith.constant 0.000000e+00 : f32
    %96 = vector.broadcast %cst_124 : f32 to vector<8x16x16xf32>
    %c0_125 = arith.constant 0 : index
    %c0_126 = arith.constant 0 : index
    %c4_127 = arith.constant 4 : index
    %97 = vector.load %arg4[%c0_125, %c0_126, %c4_127] : memref<8x24x24xf32, #tpu.memory_space<vmem>>, vector<8x16x16xf32>
    %cst_128 = arith.constant 0.0148394536 : f32
    %98 = vector.broadcast %cst_128 : f32 to vector<8x16x16xf32>
    %99 = arith.mulf %98, %97 : vector<8x16x16xf32>
    %100 = arith.addf %96, %99 : vector<8x16x16xf32>
    %c0_129 = arith.constant 0 : index
    %c1_130 = arith.constant 1 : index
    %c4_131 = arith.constant 4 : index
    %101 = vector.load %arg4[%c0_129, %c1_130, %c4_131] : memref<8x24x24xf32, #tpu.memory_space<vmem>>, vector<8x16x16xf32>
    %cst_132 = arith.constant 0.0498172902 : f32
    %102 = vector.broadcast %cst_132 : f32 to vector<8x16x16xf32>
    %103 = arith.mulf %102, %101 : vector<8x16x16xf32>
    %104 = arith.addf %100, %103 : vector<8x16x16xf32>
    %c0_133 = arith.constant 0 : index
    %c2_134 = arith.constant 2 : index
    %c4_135 = arith.constant 4 : index
    %105 = vector.load %arg4[%c0_133, %c2_134, %c4_135] : memref<8x24x24xf32, #tpu.memory_space<vmem>>, vector<8x16x16xf32>
    %cst_136 = arith.constant 0.118322507 : f32
    %106 = vector.broadcast %cst_136 : f32 to vector<8x16x16xf32>
    %107 = arith.mulf %106, %105 : vector<8x16x16xf32>
    %108 = arith.addf %104, %107 : vector<8x16x16xf32>
    %c0_137 = arith.constant 0 : index
    %c3_138 = arith.constant 3 : index
    %c4_139 = arith.constant 4 : index
    %109 = vector.load %arg4[%c0_137, %c3_138, %c4_139] : memref<8x24x24xf32, #tpu.memory_space<vmem>>, vector<8x16x16xf32>
    %cst_140 = arith.constant 1.988290e-01 : f32
    %110 = vector.broadcast %cst_140 : f32 to vector<8x16x16xf32>
    %111 = arith.mulf %110, %109 : vector<8x16x16xf32>
    %112 = arith.addf %108, %111 : vector<8x16x16xf32>
    %c0_141 = arith.constant 0 : index
    %c4_142 = arith.constant 4 : index
    %c4_143 = arith.constant 4 : index
    %113 = vector.load %arg4[%c0_141, %c4_142, %c4_143] : memref<8x24x24xf32, #tpu.memory_space<vmem>>, vector<8x16x16xf32>
    %cst_144 = arith.constant 0.236383513 : f32
    %114 = vector.broadcast %cst_144 : f32 to vector<8x16x16xf32>
    %115 = arith.mulf %114, %113 : vector<8x16x16xf32>
    %116 = arith.addf %112, %115 : vector<8x16x16xf32>
    %c0_145 = arith.constant 0 : index
    %c5_146 = arith.constant 5 : index
    %c4_147 = arith.constant 4 : index
    %117 = vector.load %arg4[%c0_145, %c5_146, %c4_147] : memref<8x24x24xf32, #tpu.memory_space<vmem>>, vector<8x16x16xf32>
    %cst_148 = arith.constant 1.988290e-01 : f32
    %118 = vector.broadcast %cst_148 : f32 to vector<8x16x16xf32>
    %119 = arith.mulf %118, %117 : vector<8x16x16xf32>
    %120 = arith.addf %116, %119 : vector<8x16x16xf32>
    %c0_149 = arith.constant 0 : index
    %c6_150 = arith.constant 6 : index
    %c4_151 = arith.constant 4 : index
    %121 = vector.load %arg4[%c0_149, %c6_150, %c4_151] : memref<8x24x24xf32, #tpu.memory_space<vmem>>, vector<8x16x16xf32>
    %cst_152 = arith.constant 0.118322507 : f32
    %122 = vector.broadcast %cst_152 : f32 to vector<8x16x16xf32>
    %123 = arith.mulf %122, %121 : vector<8x16x16xf32>
    %124 = arith.addf %120, %123 : vector<8x16x16xf32>
    %c0_153 = arith.constant 0 : index
    %c7_154 = arith.constant 7 : index
    %c4_155 = arith.constant 4 : index
    %125 = vector.load %arg4[%c0_153, %c7_154, %c4_155] : memref<8x24x24xf32, #tpu.memory_space<vmem>>, vector<8x16x16xf32>
    %cst_156 = arith.constant 0.0498172902 : f32
    %126 = vector.broadcast %cst_156 : f32 to vector<8x16x16xf32>
    %127 = arith.mulf %126, %125 : vector<8x16x16xf32>
    %128 = arith.addf %124, %127 : vector<8x16x16xf32>
    %c0_157 = arith.constant 0 : index
    %c8_158 = arith.constant 8 : index
    %c4_159 = arith.constant 4 : index
    %129 = vector.load %arg4[%c0_157, %c8_158, %c4_159] : memref<8x24x24xf32, #tpu.memory_space<vmem>>, vector<8x16x16xf32>
    %cst_160 = arith.constant 0.0148394536 : f32
    %130 = vector.broadcast %cst_160 : f32 to vector<8x16x16xf32>
    %131 = arith.mulf %130, %129 : vector<8x16x16xf32>
    %132 = arith.addf %128, %131 : vector<8x16x16xf32>
    %cst_161 = arith.constant 1.000000e+00 : f32
    %133 = vector.broadcast %cst_161 : f32 to vector<8x16x16xf32>
    %134 = arith.addf %132, %133 : vector<8x16x16xf32>
    %135 = math.log %0 : vector<8x16x16xf32>
    %cst_162 = arith.constant -1.000000e+02 : f32
    %136 = vector.broadcast %cst_162 : f32 to vector<8x16x16xf32>
    %137 = arith.maximumf %135, %136 : vector<8x16x16xf32>
    %cst_163 = arith.constant 1.000000e+00 : f32
    %138 = vector.broadcast %cst_163 : f32 to vector<8x16x16xf32>
    %139 = arith.subf %138, %0 : vector<8x16x16xf32>
    %140 = math.log %139 : vector<8x16x16xf32>
    %cst_164 = arith.constant -1.000000e+02 : f32
    %141 = vector.broadcast %cst_164 : f32 to vector<8x16x16xf32>
    %142 = arith.maximumf %140, %141 : vector<8x16x16xf32>
    %143 = arith.mulf %1, %137 : vector<8x16x16xf32>
    %cst_165 = arith.constant 1.000000e+00 : f32
    %144 = vector.broadcast %cst_165 : f32 to vector<8x16x16xf32>
    %145 = arith.subf %144, %1 : vector<8x16x16xf32>
    %146 = arith.mulf %145, %142 : vector<8x16x16xf32>
    %147 = arith.addf %143, %146 : vector<8x16x16xf32>
    %cst_166 = arith.constant 0.000000e+00 : f32
    %148 = vector.broadcast %cst_166 : f32 to vector<8x16x16xf32>
    %149 = arith.subf %148, %147 : vector<8x16x16xf32>
    %150 = arith.mulf %149, %134 : vector<8x16x16xf32>
    %151 = vector.shape_cast %150 : vector<8x16x16xf32> to vector<1x8x16x16xf32>
    %cst_167 = arith.constant dense<0.000000e+00> : vector<1xf32>
    %152 = vector.multi_reduction <add>, %151, %cst_167 [1, 2, 3] : vector<1x8x16x16xf32> to vector<1xf32>
    %153 = vector.shape_cast %152 : vector<1xf32> to vector<1x1x1x1xf32>
    %154 = vector.extract %153[0, 0, 0, 0] : f32 from vector<1x1x1x1xf32>
    %155 = vector.broadcast %154 : f32 to vector<1x1x1xf32>
    %c0_168 = arith.constant 0 : index
    %c0_169 = arith.constant 0 : index
    %c0_170 = arith.constant 0 : index
    %156 = vector.load %arg3[%c0_168, %c0_169, %c0_170] : memref<1x1x1xf32, #tpu.memory_space<vmem>>, vector<1x1x1xf32>
    tpu.vector_store %arg3[%c0_168, %c0_169, %c0_170], %155 {strides = array<i32>} : memref<1x1x1xf32, #tpu.memory_space<vmem>>, vector<1x1x1xf32>,
    return
  }
  func.func @transform_0(%arg0: i32) -> (i32, i32, i32) {
    %c0_i32 = arith.constant 0 : i32
    %c0_i32_0 = arith.constant 0 : i32
    %c0_i32_1 = arith.constant 0 : i32
    return %arg0, %c0_i32, %c0_i32_0 : i32, i32, i32
  }
  func.func @transform_1(%arg0: i32) -> (i32, i32, i32) {
    %c0_i32 = arith.constant 0 : i32
    %c0_i32_0 = arith.constant 0 : i32
    %c0_i32_1 = arith.constant 0 : i32
    return %arg0, %c0_i32, %c0_i32_0 : i32, i32, i32
  }
  func.func @transform_2(%arg0: i32) -> (i32, i32, i32) {
    %c0_i32 = arith.constant 0 : i32
    %c0_i32_0 = arith.constant 0 : i32
    %c0_i32_1 = arith.constant 0 : i32
    return %arg0, %c0_i32, %c0_i32_0 : i32, i32, i32
  }
}

</mosaic_0001>

<llo_original>
// kernel: tpu_custom_call.1
$region0: #{tpu_custom_call.1}
  #allocation0 [shape = 'u32[]', space=smem, size = 0x4, offset = 0x4, fixed_abs, tag = 'smem constant byte address 0x4 - core index']
  #allocation1 [shape = 'u32[72,128]{1,0:T(1,128)}', space=vmem, size = 0x9000, scoped, tag = 'internal scratch']
  #allocation2 [shape = 'f32[8,24,24]{2,1,0:T(8,128)}', space=vmem, size = 0x18000, scoped, tag = 'scratch operand']
  %s0 = inlined_call_operand.hbm [shape: f32[8,16,16], index: 0, kind: input, shape index: {}]
  %s1 = inlined_call_operand.hbm [shape: f32[8,16,16], index: 1, kind: input, shape index: {}]
  %s2 = inlined_call_operand.hbm [shape: f32[1,1,1], index: 2, kind: output, shape index: {}]
  %s3 = sld [smem:[#allocation0]]
  $region26: #{tpu_custom_call.1} parent=0
    _
  %s5 = ssub.s32 1, %s3
  %s6 = scalar_select 0, %s5, %s3
  $region1: #{tpu_custom_call.1} parent=0
    #allocation3 [shape = 'u8[65536]{0}', space=vmem, size = 0x10000, scoped, tag = 'input window, operand 0, single buffered']
    #allocation4 [shape = 's32[1]{0}', space=sflag, size = 0x4, scoped, tag = 'scoped memory for tpu_custom_call.1']
    #allocation5 [shape = 's32[1]{0}', space=sflag, size = 0x4, scoped, tag = 'scoped memory for tpu_custom_call.1']
    #allocation6 [shape = 'u8[65536]{0}', space=vmem, size = 0x10000, scoped, tag = 'input window, operand 1, single buffered']
    #allocation7 [shape = 's32[1]{0}', space=sflag, size = 0x4, scoped, tag = 'scoped memory for tpu_custom_call.1']
    #allocation8 [shape = 'u8[512]{0}', space=vmem, size = 0x400, scoped, tag = 'output window, operand 0, single buffered']
    %7 = vsyncpa [#allocation4], 0
    %8 = vsyncpa [#allocation7], 0
    %9 = vsyncpa [#allocation5], 0
    // Predicated region
    $region2: #{tpu_custom_call.1} parent=1 // pred_check
      _
    $region3: #{tpu_custom_call.1} parent=1 // pred_check_branch
      %11 = sbr.rel (0) target = $region5
    $region4: #{tpu_custom_call.1} parent=1 // pred_region
      %13 = vsyncadd [#allocation4], 0
      %s14 = sshll.u32 %s0, 4
      %s15 = int_to_ptr.hbm [resolvable:$true] %s14
      %s16 = sshll.u32 [#allocation3], 4
      %s17 = int_to_ptr.vmem [resolvable:$true] %s16
      %22 = dma.hbm_to_vmem [thread:$0]  %s15, 2048, %s17, [#allocation4], 128, 128, 8
    $region5: #{tpu_custom_call.1} parent=1 // pred_fallthru
      _
    // Predicated region
    $region6: #{tpu_custom_call.1} parent=1 // pred_check
      _
    $region7: #{tpu_custom_call.1} parent=1 // pred_check_branch
      %24 = sbr.rel (0) target = $region9
    $region8: #{tpu_custom_call.1} parent=1 // pred_region
      %26 = vsyncadd [#allocation7], 0
      %s27 = sshll.u32 %s1, 4
      %s28 = int_to_ptr.hbm [resolvable:$true] %s27
      %s29 = sshll.u32 [#allocation6], 4
      %s30 = int_to_ptr.vmem [resolvable:$true] %s29
      %35 = dma.hbm_to_vmem [thread:$0]  %s28, 2048, %s30, [#allocation7], 128, 128, 8
    $region9: #{tpu_custom_call.1} parent=1 // pred_fallthru
      _
    // Predicated region
    $region10: #{tpu_custom_call.1} parent=1 // pred_check
      _
    $region11: #{tpu_custom_call.1} parent=1 // pred_check_branch
      %37 = sbr.rel (0) target = $region13
    $region12: #{tpu_custom_call.1} parent=1 // pred_region
      %39 = dma.done [#allocation4], 2048
    $region13: #{tpu_custom_call.1} parent=1 // pred_fallthru
      _
    // Predicated region
    $region14: #{tpu_custom_call.1} parent=1 // pred_check
      _
    $region15: #{tpu_custom_call.1} parent=1 // pred_check_branch
      %41 = sbr.rel (0) target = $region17
    $region16: #{tpu_custom_call.1} parent=1 // pred_region
      %43 = dma.done [#allocation7], 2048
    $region17: #{tpu_custom_call.1} parent=1 // pred_fallthru
      _
    %v44 = vld [vmem:[#allocation3] sm:$0xff]
    %v45 = vld [vmem:[#allocation3 + $0x8] sm:$0xff]
    %v46 = vld [vmem:[#allocation3 + $0x10] sm:$0xff]
    %v47 = vld [vmem:[#allocation3 + $0x18] sm:$0xff]
    %v48 = vld [vmem:[#allocation3 + $0x20] sm:$0xff]
    %v49 = vld [vmem:[#allocation3 + $0x28] sm:$0xff]
    %v50 = vld [vmem:[#allocation3 + $0x30] sm:$0xff]
    %v51 = vld [vmem:[#allocation3 + $0x38] sm:$0xff]
    %v52 = vld [vmem:[#allocation3 + $0x40] sm:$0xff]
    %v53 = vld [vmem:[#allocation3 + $0x48] sm:$0xff]
    %v54 = vld [vmem:[#allocation3 + $0x50] sm:$0xff]
    %v55 = vld [vmem:[#allocation3 + $0x58] sm:$0xff]
    %v56 = vld [vmem:[#allocation3 + $0x60] sm:$0xff]
    %v57 = vld [vmem:[#allocation3 + $0x68] sm:$0xff]
    %v58 = vld [vmem:[#allocation3 + $0x70] sm:$0xff]
    %v59 = vld [vmem:[#allocation3 + $0x78] sm:$0xff]
    %v60 = vld [vmem:[#allocation6] sm:$0xff]
    %v61 = vld [vmem:[#allocation6 + $0x8] sm:$0xff]
    %v62 = vld [vmem:[#allocation6 + $0x10] sm:$0xff]
    %v63 = vld [vmem:[#allocation6 + $0x18] sm:$0xff]
    %v64 = vld [vmem:[#allocation6 + $0x20] sm:$0xff]
    %v65 = vld [vmem:[#allocation6 + $0x28] sm:$0xff]
    %v66 = vld [vmem:[#allocation6 + $0x30] sm:$0xff]
    %v67 = vld [vmem:[#allocation6 + $0x38] sm:$0xff]
    %v68 = vld [vmem:[#allocation6 + $0x40] sm:$0xff]
    %v69 = vld [vmem:[#allocation6 + $0x48] sm:$0xff]
    %v70 = vld [vmem:[#allocation6 + $0x50] sm:$0xff]
    %v71 = vld [vmem:[#allocation6 + $0x58] sm:$0xff]
    %v72 = vld [vmem:[#allocation6 + $0x60] sm:$0xff]
    %v73 = vld [vmem:[#allocation6 + $0x68] sm:$0xff]
    %v74 = vld [vmem:[#allocation6 + $0x70] sm:$0xff]
    %v75 = vld [vmem:[#allocation6 + $0x78] sm:$0xff]
    %v76 = vsub.f32 1.0, %v60
    %v77 = vsub.f32 1.0, %v61
    %v78 = vsub.f32 1.0, %v62
    %v79 = vsub.f32 1.0, %v63
    %v80 = vsub.f32 1.0, %v64
    %v81 = vsub.f32 1.0, %v65
    %v82 = vsub.f32 1.0, %v66
    %v83 = vsub.f32 1.0, %v67
    %v84 = vsub.f32 1.0, %v68
    %v85 = vsub.f32 1.0, %v69
    %v86 = vsub.f32 1.0, %v70
    %v87 = vsub.f32 1.0, %v71
    %v88 = vsub.f32 1.0, %v72
    %v89 = vsub.f32 1.0, %v73
    %v90 = vsub.f32 1.0, %v74
    %v91 = vsub.f32 1.0, %v75
    %vm92 = vcmask 31768
    %93 = vst.msk [vmem:[#allocation2 + $0x4] sm:$0xff] %vm92, -1e+30
    %94 = vst.msk [vmem:[#allocation2 + $0xc] sm:$0xff] %vm92, -1e+30
    %95 = vst.msk [vmem:[#allocation2 + $0x1c] sm:$0xff] %vm92, -1e+30
    %96 = vst.msk [vmem:[#allocation2 + $0x24] sm:$0xff] %vm92, -1e+30
    %97 = vst.msk [vmem:[#allocation2 + $0x34] sm:$0xff] %vm92, -1e+30
    %98 = vst.msk [vmem:[#allocation2 + $0x3c] sm:$0xff] %vm92, -1e+30
    %99 = vst.msk [vmem:[#allocation2 + $0x4c] sm:$0xff] %vm92, -1e+30
    %100 = vst.msk [vmem:[#allocation2 + $0x54] sm:$0xff] %vm92, -1e+30
    %101 = vst.msk [vmem:[#allocation2 + $0x64] sm:$0xff] %vm92, -1e+30
    %102 = vst.msk [vmem:[#allocation2 + $0x6c] sm:$0xff] %vm92, -1e+30
    %103 = vst.msk [vmem:[#allocation2 + $0x7c] sm:$0xff] %vm92, -1e+30
    %104 = vst.msk [vmem:[#allocation2 + $0x84] sm:$0xff] %vm92, -1e+30
    %105 = vst.msk [vmem:[#allocation2 + $0x94] sm:$0xff] %vm92, -1e+30
    %106 = vst.msk [vmem:[#allocation2 + $0x9c] sm:$0xff] %vm92, -1e+30
    %107 = vst.msk [vmem:[#allocation2 + $0xac] sm:$0xff] %vm92, -1e+30
    %108 = vst.msk [vmem:[#allocation2 + $0xb4] sm:$0xff] %vm92, -1e+30
    %vm109 = vcmask 171168
    %110 = vst.msk [vmem:[#allocation2 + $0x4] sm:$0xff] %vm109, -1e+30
    %111 = vst.msk [vmem:[#allocation2 + $0xc] sm:$0xff] %vm109, -1e+30
    %112 = vst.msk [vmem:[#allocation2 + $0x1c] sm:$0xff] %vm109, -1e+30
    %113 = vst.msk [vmem:[#allocation2 + $0x24] sm:$0xff] %vm109, -1e+30
    %114 = vst.msk [vmem:[#allocation2 + $0x34] sm:$0xff] %vm109, -1e+30
    %115 = vst.msk [vmem:[#allocation2 + $0x3c] sm:$0xff] %vm109, -1e+30
    %116 = vst.msk [vmem:[#allocation2 + $0x4c] sm:$0xff] %vm109, -1e+30
    %117 = vst.msk [vmem:[#allocation2 + $0x54] sm:$0xff] %vm109, -1e+30
    %118 = vst.msk [vmem:[#allocation2 + $0x64] sm:$0xff] %vm109, -1e+30
    %119 = vst.msk [vmem:[#allocation2 + $0x6c] sm:$0xff] %vm109, -1e+30
    %120 = vst.msk [vmem:[#allocation2 + $0x7c] sm:$0xff] %vm109, -1e+30
    %121 = vst.msk [vmem:[#allocation2 + $0x84] sm:$0xff] %vm109, -1e+30
    %122 = vst.msk [vmem:[#allocation2 + $0x94] sm:$0xff] %vm109, -1e+30
    %123 = vst.msk [vmem:[#allocation2 + $0x9c] sm:$0xff] %vm109, -1e+30
    %124 = vst.msk [vmem:[#allocation2 + $0xac] sm:$0xff] %vm109, -1e+30
    %125 = vst.msk [vmem:[#allocation2 + $0xb4] sm:$0xff] %vm109, -1e+30
    %vm126 = vcmask 155680
    %127 = vst.msk [vmem:[#allocation2 + $0x3] sm:$0x1] %vm126, -1e+30
    %128 = vst.msk [vmem:[#allocation2 + $0x1b] sm:$0x1] %vm126, -1e+30
    %129 = vst.msk [vmem:[#allocation2 + $0x33] sm:$0x1] %vm126, -1e+30
    %130 = vst.msk [vmem:[#allocation2 + $0x4b] sm:$0x1] %vm126, -1e+30
    %131 = vst.msk [vmem:[#allocation2 + $0x63] sm:$0x1] %vm126, -1e+30
    %132 = vst.msk [vmem:[#allocation2 + $0x7b] sm:$0x1] %vm126, -1e+30
    %133 = vst.msk [vmem:[#allocation2 + $0x93] sm:$0x1] %vm126, -1e+30
    %134 = vst.msk [vmem:[#allocation2 + $0xab] sm:$0x1] %vm126, -1e+30
    %135 = vst.msk [vmem:[#allocation2 + $0x14] sm:$0x1] %vm126, -1e+30
    %136 = vst.msk [vmem:[#allocation2 + $0x2c] sm:$0x1] %vm126, -1e+30
    %137 = vst.msk [vmem:[#allocation2 + $0x44] sm:$0x1] %vm126, -1e+30
    %138 = vst.msk [vmem:[#allocation2 + $0x5c] sm:$0x1] %vm126, -1e+30
    %139 = vst.msk [vmem:[#allocation2 + $0x74] sm:$0x1] %vm126, -1e+30
    %140 = vst.msk [vmem:[#allocation2 + $0x8c] sm:$0x1] %vm126, -1e+30
    %141 = vst.msk [vmem:[#allocation2 + $0xa4] sm:$0x1] %vm126, -1e+30
    %142 = vst.msk [vmem:[#allocation2 + $0xbc] sm:$0x1] %vm126, -1e+30
    %159 = vrot.lane.b32.xlu0 %v76, 4
    %v160 = vpop.permute.xlu0 %159
    %161 = vrot.lane.b32.xlu0 %v77, 4
    %v162 = vpop.permute.xlu0 %161
    %163 = vrot.lane.b32.xlu0 %v78, 4
    %v164 = vpop.permute.xlu0 %163
    %165 = vrot.lane.b32.xlu0 %v79, 4
    %v166 = vpop.permute.xlu0 %165
    %167 = vrot.lane.b32.xlu0 %v80, 4
    %v168 = vpop.permute.xlu0 %167
    %169 = vrot.lane.b32.xlu0 %v81, 4
    %v170 = vpop.permute.xlu0 %169
    %171 = vrot.lane.b32.xlu0 %v82, 4
    %v172 = vpop.permute.xlu0 %171
    %173 = vrot.lane.b32.xlu0 %v83, 4
    %v174 = vpop.permute.xlu0 %173
    %175 = vrot.lane.b32.xlu0 %v84, 4
    %v176 = vpop.permute.xlu0 %175
    %177 = vrot.lane.b32.xlu0 %v85, 4
    %v178 = vpop.permute.xlu0 %177
    %179 = vrot.lane.b32.xlu0 %v86, 4
    %v180 = vpop.permute.xlu0 %179
    %181 = vrot.lane.b32.xlu0 %v87, 4
    %v182 = vpop.permute.xlu0 %181
    %183 = vrot.lane.b32.xlu0 %v88, 4
    %v184 = vpop.permute.xlu0 %183
    %185 = vrot.lane.b32.xlu0 %v89, 4
    %v186 = vpop.permute.xlu0 %185
    %187 = vrot.lane.b32.xlu0 %v90, 4
    %v188 = vpop.permute.xlu0 %187
    %189 = vrot.lane.b32.xlu0 %v91, 4
    %v190 = vpop.permute.xlu0 %189
    %vm207 = vcmask 162848
    %208 = vst.msk [vmem:[#allocation2 + $0x4] sm:$0xff] %vm207, %v160
    %209 = vst.msk [vmem:[#allocation2 + $0xc] sm:$0xff] %vm207, %v162
    %210 = vst.msk [vmem:[#allocation2 + $0x1c] sm:$0xff] %vm207, %v164
    %211 = vst.msk [vmem:[#allocation2 + $0x24] sm:$0xff] %vm207, %v166
    %212 = vst.msk [vmem:[#allocation2 + $0x34] sm:$0xff] %vm207, %v168
    %213 = vst.msk [vmem:[#allocation2 + $0x3c] sm:$0xff] %vm207, %v170
    %214 = vst.msk [vmem:[#allocation2 + $0x4c] sm:$0xff] %vm207, %v172
    %215 = vst.msk [vmem:[#allocation2 + $0x54] sm:$0xff] %vm207, %v174
    %216 = vst.msk [vmem:[#allocation2 + $0x64] sm:$0xff] %vm207, %v176
    %217 = vst.msk [vmem:[#allocation2 + $0x6c] sm:$0xff] %vm207, %v178
    %218 = vst.msk [vmem:[#allocation2 + $0x7c] sm:$0xff] %vm207, %v180
    %219 = vst.msk [vmem:[#allocation2 + $0x84] sm:$0xff] %vm207, %v182
    %220 = vst.msk [vmem:[#allocation2 + $0x94] sm:$0xff] %vm207, %v184
    %221 = vst.msk [vmem:[#allocation2 + $0x9c] sm:$0xff] %vm207, %v186
    %222 = vst.msk [vmem:[#allocation2 + $0xac] sm:$0xff] %vm207, %v188
    %223 = vst.msk [vmem:[#allocation2 + $0xb4] sm:$0xff] %vm207, %v190
    %v224 = vld [vmem:[#allocation2 + $0x4] sm:$0xff]
    %v225 = vld [vmem:[#allocation2 + $0xc] sm:$0xff]
    %v226 = vld [vmem:[#allocation2 + $0x1c] sm:$0xff]
    %v227 = vld [vmem:[#allocation2 + $0x24] sm:$0xff]
    %v228 = vld [vmem:[#allocation2 + $0x34] sm:$0xff]
    %v229 = vld [vmem:[#allocation2 + $0x3c] sm:$0xff]
    %v230 = vld [vmem:[#allocation2 + $0x4c] sm:$0xff]
    %v231 = vld [vmem:[#allocation2 + $0x54] sm:$0xff]
    %v232 = vld [vmem:[#allocation2 + $0x64] sm:$0xff]
    %v233 = vld [vmem:[#allocation2 + $0x6c] sm:$0xff]
    %v234 = vld [vmem:[#allocation2 + $0x7c] sm:$0xff]
    %v235 = vld [vmem:[#allocation2 + $0x84] sm:$0xff]
    %v236 = vld [vmem:[#allocation2 + $0x94] sm:$0xff]
    %v237 = vld [vmem:[#allocation2 + $0x9c] sm:$0xff]
    %v238 = vld [vmem:[#allocation2 + $0xac] sm:$0xff]
    %v239 = vld [vmem:[#allocation2 + $0xb4] sm:$0xff]
    %256 = vrot.lane.b32.xlu0 %v224, 127
    %v257 = vpop.permute.xlu0 %256
    %258 = vrot.lane.b32.xlu0 %v225, 127
    %v259 = vpop.permute.xlu0 %258
    %260 = vrot.lane.b32.xlu0 %v226, 127
    %v261 = vpop.permute.xlu0 %260
    %262 = vrot.lane.b32.xlu0 %v227, 127
    %v263 = vpop.permute.xlu0 %262
    %264 = vrot.lane.b32.xlu0 %v228, 127
    %v265 = vpop.permute.xlu0 %264
    %266 = vrot.lane.b32.xlu0 %v229, 127
    %v267 = vpop.permute.xlu0 %266
    %268 = vrot.lane.b32.xlu0 %v230, 127
    %v269 = vpop.permute.xlu0 %268
    %270 = vrot.lane.b32.xlu0 %v231, 127
    %v271 = vpop.permute.xlu0 %270
    %272 = vrot.lane.b32.xlu0 %v232, 127
    %v273 = vpop.permute.xlu0 %272
    %274 = vrot.lane.b32.xlu0 %v233, 127
    %v275 = vpop.permute.xlu0 %274
    %276 = vrot.lane.b32.xlu0 %v234, 127
    %v277 = vpop.permute.xlu0 %276
    %278 = vrot.lane.b32.xlu0 %v235, 127
    %v279 = vpop.permute.xlu0 %278
    %280 = vrot.lane.b32.xlu0 %v236, 127
    %v281 = vpop.permute.xlu0 %280
    %282 = vrot.lane.b32.xlu0 %v237, 127
    %v283 = vpop.permute.xlu0 %282
    %284 = vrot.lane.b32.xlu0 %v238, 127
    %v285 = vpop.permute.xlu0 %284
    %286 = vrot.lane.b32.xlu0 %v239, 127
    %v287 = vpop.permute.xlu0 %286
    %v304 = vmax.f32 %v224, %v257
    %v305 = vmax.f32 %v225, %v259
    %v306 = vmax.f32 %v226, %v261
    %v307 = vmax.f32 %v227, %v263
    %v308 = vmax.f32 %v228, %v265
    %v309 = vmax.f32 %v229, %v267
    %v310 = vmax.f32 %v230, %v269
    %v311 = vmax.f32 %v231, %v271
    %v312 = vmax.f32 %v232, %v273
    %v313 = vmax.f32 %v233, %v275
    %v314 = vmax.f32 %v234, %v277
    %v315 = vmax.f32 %v235, %v279
    %v316 = vmax.f32 %v236, %v281
    %v317 = vmax.f32 %v237, %v283
    %v318 = vmax.f32 %v238, %v285
    %v319 = vmax.f32 %v239, %v287
    %320 = vrot.lane.b32.xlu0 %v224, 126
    %v321 = vpop.permute.xlu0 %320
    %322 = vrot.lane.b32.xlu0 %v225, 126
    %v323 = vpop.permute.xlu0 %322
    %324 = vrot.lane.b32.xlu0 %v226, 126
    %v325 = vpop.permute.xlu0 %324
    %326 = vrot.lane.b32.xlu0 %v227, 126
    %v327 = vpop.permute.xlu0 %326
    %328 = vrot.lane.b32.xlu0 %v228, 126
    %v329 = vpop.permute.xlu0 %328
    %330 = vrot.lane.b32.xlu0 %v229, 126
    %v331 = vpop.permute.xlu0 %330
    %332 = vrot.lane.b32.xlu0 %v230, 126
    %v333 = vpop.permute.xlu0 %332
    %334 = vrot.lane.b32.xlu0 %v231, 126
    %v335 = vpop.permute.xlu0 %334
    %336 = vrot.lane.b32.xlu0 %v232, 126
    %v337 = vpop.permute.xlu0 %336
    %338 = vrot.lane.b32.xlu0 %v233, 126
    %v339 = vpop.permute.xlu0 %338
    %340 = vrot.lane.b32.xlu0 %v234, 126
    %v341 = vpop.permute.xlu0 %340
    %342 = vrot.lane.b32.xlu0 %v235, 126
    %v343 = vpop.permute.xlu0 %342
    %344 = vrot.lane.b32.xlu0 %v236, 126
    %v345 = vpop.permute.xlu0 %344
    %346 = vrot.lane.b32.xlu0 %v237, 126
    %v347 = vpop.permute.xlu0 %346
    %348 = vrot.lane.b32.xlu0 %v238, 126
    %v349 = vpop.permute.xlu0 %348
    %350 = vrot.lane.b32.xlu0 %v239, 126
    %v351 = vpop.permute.xlu0 %350
    %v368 = vmax.f32 %v304, %v321
    %v369 = vmax.f32 %v305, %v323
    %v370 = vmax.f32 %v306, %v325
    %v371 = vmax.f32 %v307, %v327
    %v372 = vmax.f32 %v308, %v329
    %v373 = vmax.f32 %v309, %v331
    %v374 = vmax.f32 %v310, %v333
    %v375 = vmax.f32 %v311, %v335
    %v376 = vmax.f32 %v312, %v337
    %v377 = vmax.f32 %v313, %v339
    %v378 = vmax.f32 %v314, %v341
    %v379 = vmax.f32 %v315, %v343
    %v380 = vmax.f32 %v316, %v345
    %v381 = vmax.f32 %v317, %v347
    %v382 = vmax.f32 %v318, %v349
    %v383 = vmax.f32 %v319, %v351
    %400 = vrot.lane.b32.xlu0 %v368, 1
    %v401 = vpop.permute.xlu0 %400
    %402 = vrot.lane.b32.xlu0 %v369, 1
    %v403 = vpop.permute.xlu0 %402
    %404 = vrot.lane.b32.xlu0 %v370, 1
    %v405 = vpop.permute.xlu0 %404
    %406 = vrot.lane.b32.xlu0 %v371, 1
    %v407 = vpop.permute.xlu0 %406
    %408 = vrot.lane.b32.xlu0 %v372, 1
    %v409 = vpop.permute.xlu0 %408
    %410 = vrot.lane.b32.xlu0 %v373, 1
    %v411 = vpop.permute.xlu0 %410
    %412 = vrot.lane.b32.xlu0 %v374, 1
    %v413 = vpop.permute.xlu0 %412
    %414 = vrot.lane.b32.xlu0 %v375, 1
    %v415 = vpop.permute.xlu0 %414
    %416 = vrot.lane.b32.xlu0 %v376, 1
    %v417 = vpop.permute.xlu0 %416
    %418 = vrot.lane.b32.xlu0 %v377, 1
    %v419 = vpop.permute.xlu0 %418
    %420 = vrot.lane.b32.xlu0 %v378, 1
    %v421 = vpop.permute.xlu0 %420
    %422 = vrot.lane.b32.xlu0 %v379, 1
    %v423 = vpop.permute.xlu0 %422
    %424 = vrot.lane.b32.xlu0 %v380, 1
    %v425 = vpop.permute.xlu0 %424
    %426 = vrot.lane.b32.xlu0 %v381, 1
    %v427 = vpop.permute.xlu0 %426
    %428 = vrot.lane.b32.xlu0 %v382, 1
    %v429 = vpop.permute.xlu0 %428
    %430 = vrot.lane.b32.xlu0 %v383, 1
    %v431 = vpop.permute.xlu0 %430
    %448 = vst.msk [vmem:[#allocation2 + $0x4] sm:$0xff] %vm207, %v401
    %449 = vst.msk [vmem:[#allocation2 + $0xc] sm:$0xff] %vm207, %v403
    %450 = vst.msk [vmem:[#allocation2 + $0x1c] sm:$0xff] %vm207, %v405
    %451 = vst.msk [vmem:[#allocation2 + $0x24] sm:$0xff] %vm207, %v407
    %452 = vst.msk [vmem:[#allocation2 + $0x34] sm:$0xff] %vm207, %v409
    %453 = vst.msk [vmem:[#allocation2 + $0x3c] sm:$0xff] %vm207, %v411
    %454 = vst.msk [vmem:[#allocation2 + $0x4c] sm:$0xff] %vm207, %v413
    %455 = vst.msk [vmem:[#allocation2 + $0x54] sm:$0xff] %vm207, %v415
    %456 = vst.msk [vmem:[#allocation2 + $0x64] sm:$0xff] %vm207, %v417
    %457 = vst.msk [vmem:[#allocation2 + $0x6c] sm:$0xff] %vm207, %v419
    %458 = vst.msk [vmem:[#allocation2 + $0x7c] sm:$0xff] %vm207, %v421
    %459 = vst.msk [vmem:[#allocation2 + $0x84] sm:$0xff] %vm207, %v423
    %460 = vst.msk [vmem:[#allocation2 + $0x94] sm:$0xff] %vm207, %v425
    %461 = vst.msk [vmem:[#allocation2 + $0x9c] sm:$0xff] %vm207, %v427
    %462 = vst.msk [vmem:[#allocation2 + $0xac] sm:$0xff] %vm207, %v429
    %463 = vst.msk [vmem:[#allocation2 + $0xb4] sm:$0xff] %vm207, %v431
    %v464 = vld [vmem:[#allocation2 + $0x3] sm:$0xff]
    %v465 = vld [vmem:[#allocation2 + $0xb] sm:$0xff]
    %v466 = vld [vmem:[#allocation2 + $0x1b] sm:$0xff]
    %v467 = vld [vmem:[#allocation2 + $0x23] sm:$0xff]
    %v468 = vld [vmem:[#allocation2 + $0x33] sm:$0xff]
    %v469 = vld [vmem:[#allocation2 + $0x3b] sm:$0xff]
    %v470 = vld [vmem:[#allocation2 + $0x4b] sm:$0xff]
    %v471 = vld [vmem:[#allocation2 + $0x53] sm:$0xff]
    %v472 = vld [vmem:[#allocation2 + $0x63] sm:$0xff]
    %v473 = vld [vmem:[#allocation2 + $0x6b] sm:$0xff]
    %v474 = vld [vmem:[#allocation2 + $0x7b] sm:$0xff]
    %v475 = vld [vmem:[#allocation2 + $0x83] sm:$0xff]
    %v476 = vld [vmem:[#allocation2 + $0x93] sm:$0xff]
    %v477 = vld [vmem:[#allocation2 + $0x9b] sm:$0xff]
    %v478 = vld [vmem:[#allocation2 + $0xab] sm:$0xff]
    %v479 = vld [vmem:[#allocation2 + $0xb3] sm:$0xff]
    %v480 = vld [vmem:[#allocation2 + $0x4] sm:$0xff]
    %v481 = vld [vmem:[#allocation2 + $0xc] sm:$0xff]
    %v482 = vld [vmem:[#allocation2 + $0x1c] sm:$0xff]
    %v483 = vld [vmem:[#allocation2 + $0x24] sm:$0xff]
    %v484 = vld [vmem:[#allocation2 + $0x34] sm:$0xff]
    %v485 = vld [vmem:[#allocation2 + $0x3c] sm:$0xff]
    %v486 = vld [vmem:[#allocation2 + $0x4c] sm:$0xff]
    %v487 = vld [vmem:[#allocation2 + $0x54] sm:$0xff]
    %v488 = vld [vmem:[#allocation2 + $0x64] sm:$0xff]
    %v489 = vld [vmem:[#allocation2 + $0x6c] sm:$0xff]
    %v490 = vld [vmem:[#allocation2 + $0x7c] sm:$0xff]
    %v491 = vld [vmem:[#allocation2 + $0x84] sm:$0xff]
    %v492 = vld [vmem:[#allocation2 + $0x94] sm:$0xff]
    %v493 = vld [vmem:[#allocation2 + $0x9c] sm:$0xff]
    %v494 = vld [vmem:[#allocation2 + $0xac] sm:$0xff]
    %v495 = vld [vmem:[#allocation2 + $0xb4] sm:$0xff]
    %v496 = vmax.f32 %v464, %v480
    %v497 = vmax.f32 %v465, %v481
    %v498 = vmax.f32 %v466, %v482
    %v499 = vmax.f32 %v467, %v483
    %v500 = vmax.f32 %v468, %v484
    %v501 = vmax.f32 %v469, %v485
    %v502 = vmax.f32 %v470, %v486
    %v503 = vmax.f32 %v471, %v487
    %v504 = vmax.f32 %v472, %v488
    %v505 = vmax.f32 %v473, %v489
    %v506 = vmax.f32 %v474, %v490
    %v507 = vmax.f32 %v475, %v491
    %v508 = vmax.f32 %v476, %v492
    %v509 = vmax.f32 %v477, %v493
    %v510 = vmax.f32 %v478, %v494
    %v511 = vmax.f32 %v479, %v495
    %v512 = vld [vmem:[#allocation2 + $0x5] sm:$0xff]
    %v513 = vld [vmem:[#allocation2 + $0xd] sm:$0xff]
    %v514 = vld [vmem:[#allocation2 + $0x1d] sm:$0xff]
    %v515 = vld [vmem:[#allocation2 + $0x25] sm:$0xff]
    %v516 = vld [vmem:[#allocation2 + $0x35] sm:$0xff]
    %v517 = vld [vmem:[#allocation2 + $0x3d] sm:$0xff]
    %v518 = vld [vmem:[#allocation2 + $0x4d] sm:$0xff]
    %v519 = vld [vmem:[#allocation2 + $0x55] sm:$0xff]
    %v520 = vld [vmem:[#allocation2 + $0x65] sm:$0xff]
    %v521 = vld [vmem:[#allocation2 + $0x6d] sm:$0xff]
    %v522 = vld [vmem:[#allocation2 + $0x7d] sm:$0xff]
    %v523 = vld [vmem:[#allocation2 + $0x85] sm:$0xff]
    %v524 = vld [vmem:[#allocation2 + $0x95] sm:$0xff]
    %v525 = vld [vmem:[#allocation2 + $0x9d] sm:$0xff]
    %v526 = vld [vmem:[#allocation2 + $0xad] sm:$0xff]
    %v527 = vld [vmem:[#allocation2 + $0xb5] sm:$0xff]
    %v528 = vmax.f32 %v496, %v512
    %v529 = vmax.f32 %v497, %v513
    %v530 = vmax.f32 %v498, %v514
    %v531 = vmax.f32 %v499, %v515
    %v532 = vmax.f32 %v500, %v516
    %v533 = vmax.f32 %v501, %v517
    %v534 = vmax.f32 %v502, %v518
    %v535 = vmax.f32 %v503, %v519
    %v536 = vmax.f32 %v504, %v520
    %v537 = vmax.f32 %v505, %v521
    %v538 = vmax.f32 %v506, %v522
    %v539 = vmax.f32 %v507, %v523
    %v540 = vmax.f32 %v508, %v524
    %v541 = vmax.f32 %v509, %v525
    %v542 = vmax.f32 %v510, %v526
    %v543 = vmax.f32 %v511, %v527
    %v544 = vsub.f32 %v528, %v160
    %v545 = vsub.f32 %v529, %v162
    %v546 = vsub.f32 %v530, %v164
    %v547 = vsub.f32 %v531, %v166
    %v548 = vsub.f32 %v532, %v168
    %v549 = vsub.f32 %v533, %v170
    %v550 = vsub.f32 %v534, %v172
    %v551 = vsub.f32 %v535, %v174
    %v552 = vsub.f32 %v536, %v176
    %v553 = vsub.f32 %v537, %v178
    %v554 = vsub.f32 %v538, %v180
    %v555 = vsub.f32 %v539, %v182
    %v556 = vsub.f32 %v540, %v184
    %v557 = vsub.f32 %v541, %v186
    %v558 = vsub.f32 %v542, %v188
    %v559 = vsub.f32 %v543, %v190
    %560 = vst.msk [vmem:[#allocation2 + $0x4] sm:$0xff] %vm207, %v544
    %561 = vst.msk [vmem:[#allocation2 + $0xc] sm:$0xff] %vm207, %v545
    %562 = vst.msk [vmem:[#allocation2 + $0x1c] sm:$0xff] %vm207, %v546
    %563 = vst.msk [vmem:[#allocation2 + $0x24] sm:$0xff] %vm207, %v547
    %564 = vst.msk [vmem:[#allocation2 + $0x34] sm:$0xff] %vm207, %v548
    %565 = vst.msk [vmem:[#allocation2 + $0x3c] sm:$0xff] %vm207, %v549
    %566 = vst.msk [vmem:[#allocation2 + $0x4c] sm:$0xff] %vm207, %v550
    %567 = vst.msk [vmem:[#allocation2 + $0x54] sm:$0xff] %vm207, %v551
    %568 = vst.msk [vmem:[#allocation2 + $0x64] sm:$0xff] %vm207, %v552
    %569 = vst.msk [vmem:[#allocation2 + $0x6c] sm:$0xff] %vm207, %v553
    %570 = vst.msk [vmem:[#allocation2 + $0x7c] sm:$0xff] %vm207, %v554
    %571 = vst.msk [vmem:[#allocation2 + $0x84] sm:$0xff] %vm207, %v555
    %572 = vst.msk [vmem:[#allocation2 + $0x94] sm:$0xff] %vm207, %v556
    %573 = vst.msk [vmem:[#allocation2 + $0x9c] sm:$0xff] %vm207, %v557
    %574 = vst.msk [vmem:[#allocation2 + $0xac] sm:$0xff] %vm207, %v558
    %575 = vst.msk [vmem:[#allocation2 + $0xb4] sm:$0xff] %vm207, %v559
    %592 = vrot.lane.b32.xlu0 %v544, 126
    %v593 = vpop.permute.xlu0 %592
    %594 = vrot.lane.b32.xlu0 %v545, 126
    %v595 = vpop.permute.xlu0 %594
    %596 = vrot.lane.b32.xlu0 %v546, 126
    %v597 = vpop.permute.xlu0 %596
    %598 = vrot.lane.b32.xlu0 %v547, 126
    %v599 = vpop.permute.xlu0 %598
    %600 = vrot.lane.b32.xlu0 %v548, 126
    %v601 = vpop.permute.xlu0 %600
    %602 = vrot.lane.b32.xlu0 %v549, 126
    %v603 = vpop.permute.xlu0 %602
    %604 = vrot.lane.b32.xlu0 %v550, 126
    %v605 = vpop.permute.xlu0 %604
    %606 = vrot.lane.b32.xlu0 %v551, 126
    %v607 = vpop.permute.xlu0 %606
    %608 = vrot.lane.b32.xlu0 %v552, 126
    %v609 = vpop.permute.xlu0 %608
    %610 = vrot.lane.b32.xlu0 %v553, 126
    %v611 = vpop.permute.xlu0 %610
    %612 = vrot.lane.b32.xlu0 %v554, 126
    %v613 = vpop.permute.xlu0 %612
    %614 = vrot.lane.b32.xlu0 %v555, 126
    %v615 = vpop.permute.xlu0 %614
    %616 = vrot.lane.b32.xlu0 %v556, 126
    %v617 = vpop.permute.xlu0 %616
    %618 = vrot.lane.b32.xlu0 %v557, 126
    %v619 = vpop.permute.xlu0 %618
    %620 = vrot.lane.b32.xlu0 %v558, 126
    %v621 = vpop.permute.xlu0 %620
    %622 = vrot.lane.b32.xlu0 %v559, 126
    %v623 = vpop.permute.xlu0 %622
    %640 = vst.msk [vmem:[#allocation2 + $0x4] sm:$0xff] %vm92, %v593
    %641 = vst.msk [vmem:[#allocation2 + $0xc] sm:$0xff] %vm92, %v595
    %642 = vst.msk [vmem:[#allocation2 + $0x1c] sm:$0xff] %vm92, %v597
    %643 = vst.msk [vmem:[#allocation2 + $0x24] sm:$0xff] %vm92, %v599
    %644 = vst.msk [vmem:[#allocation2 + $0x34] sm:$0xff] %vm92, %v601
    %645 = vst.msk [vmem:[#allocation2 + $0x3c] sm:$0xff] %vm92, %v603
    %646 = vst.msk [vmem:[#allocation2 + $0x4c] sm:$0xff] %vm92, %v605
    %647 = vst.msk [vmem:[#allocation2 + $0x54] sm:$0xff] %vm92, %v607
    %648 = vst.msk [vmem:[#allocation2 + $0x64] sm:$0xff] %vm92, %v609
    %649 = vst.msk [vmem:[#allocation2 + $0x6c] sm:$0xff] %vm92, %v611
    %650 = vst.msk [vmem:[#allocation2 + $0x7c] sm:$0xff] %vm92, %v613
    %651 = vst.msk [vmem:[#allocation2 + $0x84] sm:$0xff] %vm92, %v615
    %652 = vst.msk [vmem:[#allocation2 + $0x94] sm:$0xff] %vm92, %v617
    %653 = vst.msk [vmem:[#allocation2 + $0x9c] sm:$0xff] %vm92, %v619
    %654 = vst.msk [vmem:[#allocation2 + $0xac] sm:$0xff] %vm92, %v621
    %655 = vst.msk [vmem:[#allocation2 + $0xb4] sm:$0xff] %vm92, %v623
    %656 = vrot.lane.b32.xlu0 %v544, 2
    %v657 = vpop.permute.xlu0 %656
    %658 = vrot.lane.b32.xlu0 %v545, 2
    %v659 = vpop.permute.xlu0 %658
    %660 = vrot.lane.b32.xlu0 %v546, 2
    %v661 = vpop.permute.xlu0 %660
    %662 = vrot.lane.b32.xlu0 %v547, 2
    %v663 = vpop.permute.xlu0 %662
    %664 = vrot.lane.b32.xlu0 %v548, 2
    %v665 = vpop.permute.xlu0 %664
    %666 = vrot.lane.b32.xlu0 %v549, 2
    %v667 = vpop.permute.xlu0 %666
    %668 = vrot.lane.b32.xlu0 %v550, 2
    %v669 = vpop.permute.xlu0 %668
    %670 = vrot.lane.b32.xlu0 %v551, 2
    %v671 = vpop.permute.xlu0 %670
    %672 = vrot.lane.b32.xlu0 %v552, 2
    %v673 = vpop.permute.xlu0 %672
    %674 = vrot.lane.b32.xlu0 %v553, 2
    %v675 = vpop.permute.xlu0 %674
    %676 = vrot.lane.b32.xlu0 %v554, 2
    %v677 = vpop.permute.xlu0 %676
    %678 = vrot.lane.b32.xlu0 %v555, 2
    %v679 = vpop.permute.xlu0 %678
    %680 = vrot.lane.b32.xlu0 %v556, 2
    %v681 = vpop.permute.xlu0 %680
    %682 = vrot.lane.b32.xlu0 %v557, 2
    %v683 = vpop.permute.xlu0 %682
    %684 = vrot.lane.b32.xlu0 %v558, 2
    %v685 = vpop.permute.xlu0 %684
    %686 = vrot.lane.b32.xlu0 %v559, 2
    %v687 = vpop.permute.xlu0 %686
    %704 = vst.msk [vmem:[#allocation2 + $0x4] sm:$0xff] %vm109, %v657
    %705 = vst.msk [vmem:[#allocation2 + $0xc] sm:$0xff] %vm109, %v659
    %706 = vst.msk [vmem:[#allocation2 + $0x1c] sm:$0xff] %vm109, %v661
    %707 = vst.msk [vmem:[#allocation2 + $0x24] sm:$0xff] %vm109, %v663
    %708 = vst.msk [vmem:[#allocation2 + $0x34] sm:$0xff] %vm109, %v665
    %709 = vst.msk [vmem:[#allocation2 + $0x3c] sm:$0xff] %vm109, %v667
    %710 = vst.msk [vmem:[#allocation2 + $0x4c] sm:$0xff] %vm109, %v669
    %711 = vst.msk [vmem:[#allocation2 + $0x54] sm:$0xff] %vm109, %v671
    %712 = vst.msk [vmem:[#allocation2 + $0x64] sm:$0xff] %vm109, %v673
    %713 = vst.msk [vmem:[#allocation2 + $0x6c] sm:$0xff] %vm109, %v675
    %714 = vst.msk [vmem:[#allocation2 + $0x7c] sm:$0xff] %vm109, %v677
    %715 = vst.msk [vmem:[#allocation2 + $0x84] sm:$0xff] %vm109, %v679
    %716 = vst.msk [vmem:[#allocation2 + $0x94] sm:$0xff] %vm109, %v681
    %717 = vst.msk [vmem:[#allocation2 + $0x9c] sm:$0xff] %vm109, %v683
    %718 = vst.msk [vmem:[#allocation2 + $0xac] sm:$0xff] %vm109, %v685
    %719 = vst.msk [vmem:[#allocation2 + $0xb4] sm:$0xff] %vm109, %v687
    %720 = vrot.lane.b32.xlu0 %v544, 124
    %v721 = vpop.permute.xlu0 %720
    %722 = vrot.lane.b32.xlu0 %v545, 124
    %v723 = vpop.permute.xlu0 %722
    %724 = vrot.lane.b32.xlu0 %v546, 124
    %v725 = vpop.permute.xlu0 %724
    %726 = vrot.lane.b32.xlu0 %v547, 124
    %v727 = vpop.permute.xlu0 %726
    %728 = vrot.lane.b32.xlu0 %v548, 124
    %v729 = vpop.permute.xlu0 %728
    %730 = vrot.lane.b32.xlu0 %v549, 124
    %v731 = vpop.permute.xlu0 %730
    %732 = vrot.lane.b32.xlu0 %v550, 124
    %v733 = vpop.permute.xlu0 %732
    %734 = vrot.lane.b32.xlu0 %v551, 124
    %v735 = vpop.permute.xlu0 %734
    %736 = vrot.lane.b32.xlu0 %v552, 124
    %v737 = vpop.permute.xlu0 %736
    %738 = vrot.lane.b32.xlu0 %v553, 124
    %v739 = vpop.permute.xlu0 %738
    %740 = vrot.lane.b32.xlu0 %v554, 124
    %v741 = vpop.permute.xlu0 %740
    %742 = vrot.lane.b32.xlu0 %v555, 124
    %v743 = vpop.permute.xlu0 %742
    %744 = vrot.lane.b32.xlu0 %v556, 124
    %v745 = vpop.permute.xlu0 %744
    %746 = vrot.lane.b32.xlu0 %v557, 124
    %v747 = vpop.permute.xlu0 %746
    %748 = vrot.lane.b32.xlu0 %v558, 124
    %v749 = vpop.permute.xlu0 %748
    %750 = vrot.lane.b32.xlu0 %v559, 124
    %v751 = vpop.permute.xlu0 %750
    %vm768 = vcmask 23568
    %769 = vst.msk [vmem:[#allocation2 + $0x4] sm:$0xff] %vm768, %v721
    %770 = vst.msk [vmem:[#allocation2 + $0xc] sm:$0xff] %vm768, %v723
    %771 = vst.msk [vmem:[#allocation2 + $0x1c] sm:$0xff] %vm768, %v725
    %772 = vst.msk [vmem:[#allocation2 + $0x24] sm:$0xff] %vm768, %v727
    %773 = vst.msk [vmem:[#allocation2 + $0x34] sm:$0xff] %vm768, %v729
    %774 = vst.msk [vmem:[#allocation2 + $0x3c] sm:$0xff] %vm768, %v731
    %775 = vst.msk [vmem:[#allocation2 + $0x4c] sm:$0xff] %vm768, %v733
    %776 = vst.msk [vmem:[#allocation2 + $0x54] sm:$0xff] %vm768, %v735
    %777 = vst.msk [vmem:[#allocation2 + $0x64] sm:$0xff] %vm768, %v737
    %778 = vst.msk [vmem:[#allocation2 + $0x6c] sm:$0xff] %vm768, %v739
    %779 = vst.msk [vmem:[#allocation2 + $0x7c] sm:$0xff] %vm768, %v741
    %780 = vst.msk [vmem:[#allocation2 + $0x84] sm:$0xff] %vm768, %v743
    %781 = vst.msk [vmem:[#allocation2 + $0x94] sm:$0xff] %vm768, %v745
    %782 = vst.msk [vmem:[#allocation2 + $0x9c] sm:$0xff] %vm768, %v747
    %783 = vst.msk [vmem:[#allocation2 + $0xac] sm:$0xff] %vm768, %v749
    %784 = vst.msk [vmem:[#allocation2 + $0xb4] sm:$0xff] %vm768, %v751
    %785 = vrot.lane.b32.xlu0 %v544, 4
    %v786 = vpop.permute.xlu0 %785
    %787 = vrot.lane.b32.xlu0 %v545, 4
    %v788 = vpop.permute.xlu0 %787
    %789 = vrot.lane.b32.xlu0 %v546, 4
    %v790 = vpop.permute.xlu0 %789
    %791 = vrot.lane.b32.xlu0 %v547, 4
    %v792 = vpop.permute.xlu0 %791
    %793 = vrot.lane.b32.xlu0 %v548, 4
    %v794 = vpop.permute.xlu0 %793
    %795 = vrot.lane.b32.xlu0 %v549, 4
    %v796 = vpop.permute.xlu0 %795
    %797 = vrot.lane.b32.xlu0 %v550, 4
    %v798 = vpop.permute.xlu0 %797
    %799 = vrot.lane.b32.xlu0 %v551, 4
    %v800 = vpop.permute.xlu0 %799
    %801 = vrot.lane.b32.xlu0 %v552, 4
    %v802 = vpop.permute.xlu0 %801
    %803 = vrot.lane.b32.xlu0 %v553, 4
    %v804 = vpop.permute.xlu0 %803
    %805 = vrot.lane.b32.xlu0 %v554, 4
    %v806 = vpop.permute.xlu0 %805
    %807 = vrot.lane.b32.xlu0 %v555, 4
    %v808 = vpop.permute.xlu0 %807
    %809 = vrot.lane.b32.xlu0 %v556, 4
    %v810 = vpop.permute.xlu0 %809
    %811 = vrot.lane.b32.xlu0 %v557, 4
    %v812 = vpop.permute.xlu0 %811
    %813 = vrot.lane.b32.xlu0 %v558, 4
    %v814 = vpop.permute.xlu0 %813
    %815 = vrot.lane.b32.xlu0 %v559, 4
    %v816 = vpop.permute.xlu0 %815
    %vm833 = vcmask 179368
    %834 = vst.msk [vmem:[#allocation2 + $0x4] sm:$0xff] %vm833, %v786
    %835 = vst.msk [vmem:[#allocation2 + $0xc] sm:$0xff] %vm833, %v788
    %836 = vst.msk [vmem:[#allocation2 + $0x1c] sm:$0xff] %vm833, %v790
    %837 = vst.msk [vmem:[#allocation2 + $0x24] sm:$0xff] %vm833, %v792
    %838 = vst.msk [vmem:[#allocation2 + $0x34] sm:$0xff] %vm833, %v794
    %839 = vst.msk [vmem:[#allocation2 + $0x3c] sm:$0xff] %vm833, %v796
    %840 = vst.msk [vmem:[#allocation2 + $0x4c] sm:$0xff] %vm833, %v798
    %841 = vst.msk [vmem:[#allocation2 + $0x54] sm:$0xff] %vm833, %v800
    %842 = vst.msk [vmem:[#allocation2 + $0x64] sm:$0xff] %vm833, %v802
    %843 = vst.msk [vmem:[#allocation2 + $0x6c] sm:$0xff] %vm833, %v804
    %844 = vst.msk [vmem:[#allocation2 + $0x7c] sm:$0xff] %vm833, %v806
    %845 = vst.msk [vmem:[#allocation2 + $0x84] sm:$0xff] %vm833, %v808
    %846 = vst.msk [vmem:[#allocation2 + $0x94] sm:$0xff] %vm833, %v810
    %847 = vst.msk [vmem:[#allocation2 + $0x9c] sm:$0xff] %vm833, %v812
    %848 = vst.msk [vmem:[#allocation2 + $0xac] sm:$0xff] %vm833, %v814
    %849 = vst.msk [vmem:[#allocation2 + $0xb4] sm:$0xff] %vm833, %v816
    %850 = vrot.lane.b32.xlu0 %v544, 122
    %v851 = vpop.permute.xlu0 %850
    %852 = vrot.lane.b32.xlu0 %v545, 122
    %v853 = vpop.permute.xlu0 %852
    %854 = vrot.lane.b32.xlu0 %v546, 122
    %v855 = vpop.permute.xlu0 %854
    %856 = vrot.lane.b32.xlu0 %v547, 122
    %v857 = vpop.permute.xlu0 %856
    %858 = vrot.lane.b32.xlu0 %v548, 122
    %v859 = vpop.permute.xlu0 %858
    %860 = vrot.lane.b32.xlu0 %v549, 122
    %v861 = vpop.permute.xlu0 %860
    %862 = vrot.lane.b32.xlu0 %v550, 122
    %v863 = vpop.permute.xlu0 %862
    %864 = vrot.lane.b32.xlu0 %v551, 122
    %v865 = vpop.permute.xlu0 %864
    %866 = vrot.lane.b32.xlu0 %v552, 122
    %v867 = vpop.permute.xlu0 %866
    %868 = vrot.lane.b32.xlu0 %v553, 122
    %v869 = vpop.permute.xlu0 %868
    %870 = vrot.lane.b32.xlu0 %v554, 122
    %v871 = vpop.permute.xlu0 %870
    %872 = vrot.lane.b32.xlu0 %v555, 122
    %v873 = vpop.permute.xlu0 %872
    %874 = vrot.lane.b32.xlu0 %v556, 122
    %v875 = vpop.permute.xlu0 %874
    %876 = vrot.lane.b32.xlu0 %v557, 122
    %v877 = vpop.permute.xlu0 %876
    %878 = vrot.lane.b32.xlu0 %v558, 122
    %v879 = vpop.permute.xlu0 %878
    %880 = vrot.lane.b32.xlu0 %v559, 122
    %v881 = vpop.permute.xlu0 %880
    %vm898 = vcmask 15368
    %899 = vst.msk [vmem:[#allocation2 + $0x4] sm:$0xff] %vm898, %v851
    %900 = vst.msk [vmem:[#allocation2 + $0xc] sm:$0xff] %vm898, %v853
    %901 = vst.msk [vmem:[#allocation2 + $0x1c] sm:$0xff] %vm898, %v855
    %902 = vst.msk [vmem:[#allocation2 + $0x24] sm:$0xff] %vm898, %v857
    %903 = vst.msk [vmem:[#allocation2 + $0x34] sm:$0xff] %vm898, %v859
    %904 = vst.msk [vmem:[#allocation2 + $0x3c] sm:$0xff] %vm898, %v861
    %905 = vst.msk [vmem:[#allocation2 + $0x4c] sm:$0xff] %vm898, %v863
    %906 = vst.msk [vmem:[#allocation2 + $0x54] sm:$0xff] %vm898, %v865
    %907 = vst.msk [vmem:[#allocation2 + $0x64] sm:$0xff] %vm898, %v867
    %908 = vst.msk [vmem:[#allocation2 + $0x6c] sm:$0xff] %vm898, %v869
    %909 = vst.msk [vmem:[#allocation2 + $0x7c] sm:$0xff] %vm898, %v871
    %910 = vst.msk [vmem:[#allocation2 + $0x84] sm:$0xff] %vm898, %v873
    %911 = vst.msk [vmem:[#allocation2 + $0x94] sm:$0xff] %vm898, %v875
    %912 = vst.msk [vmem:[#allocation2 + $0x9c] sm:$0xff] %vm898, %v877
    %913 = vst.msk [vmem:[#allocation2 + $0xac] sm:$0xff] %vm898, %v879
    %914 = vst.msk [vmem:[#allocation2 + $0xb4] sm:$0xff] %vm898, %v881
    %915 = vrot.lane.b32.xlu0 %v544, 6
    %v916 = vpop.permute.xlu0 %915
    %917 = vrot.lane.b32.xlu0 %v545, 6
    %v918 = vpop.permute.xlu0 %917
    %919 = vrot.lane.b32.xlu0 %v546, 6
    %v920 = vpop.permute.xlu0 %919
    %921 = vrot.lane.b32.xlu0 %v547, 6
    %v922 = vpop.permute.xlu0 %921
    %923 = vrot.lane.b32.xlu0 %v548, 6
    %v924 = vpop.permute.xlu0 %923
    %925 = vrot.lane.b32.xlu0 %v549, 6
    %v926 = vpop.permute.xlu0 %925
    %927 = vrot.lane.b32.xlu0 %v550, 6
    %v928 = vpop.permute.xlu0 %927
    %929 = vrot.lane.b32.xlu0 %v551, 6
    %v930 = vpop.permute.xlu0 %929
    %931 = vrot.lane.b32.xlu0 %v552, 6
    %v932 = vpop.permute.xlu0 %931
    %933 = vrot.lane.b32.xlu0 %v553, 6
    %v934 = vpop.permute.xlu0 %933
    %935 = vrot.lane.b32.xlu0 %v554, 6
    %v936 = vpop.permute.xlu0 %935
    %937 = vrot.lane.b32.xlu0 %v555, 6
    %v938 = vpop.permute.xlu0 %937
    %939 = vrot.lane.b32.xlu0 %v556, 6
    %v940 = vpop.permute.xlu0 %939
    %941 = vrot.lane.b32.xlu0 %v557, 6
    %v942 = vpop.permute.xlu0 %941
    %943 = vrot.lane.b32.xlu0 %v558, 6
    %v944 = vpop.permute.xlu0 %943
    %945 = vrot.lane.b32.xlu0 %v559, 6
    %v946 = vpop.permute.xlu0 %945
    %vm963 = vcmask 187568
    %964 = vst.msk [vmem:[#allocation2 + $0x4] sm:$0xff] %vm963, %v916
    %965 = vst.msk [vmem:[#allocation2 + $0xc] sm:$0xff] %vm963, %v918
    %966 = vst.msk [vmem:[#allocation2 + $0x1c] sm:$0xff] %vm963, %v920
    %967 = vst.msk [vmem:[#allocation2 + $0x24] sm:$0xff] %vm963, %v922
    %968 = vst.msk [vmem:[#allocation2 + $0x34] sm:$0xff] %vm963, %v924
    %969 = vst.msk [vmem:[#allocation2 + $0x3c] sm:$0xff] %vm963, %v926
    %970 = vst.msk [vmem:[#allocation2 + $0x4c] sm:$0xff] %vm963, %v928
    %971 = vst.msk [vmem:[#allocation2 + $0x54] sm:$0xff] %vm963, %v930
    %972 = vst.msk [vmem:[#allocation2 + $0x64] sm:$0xff] %vm963, %v932
    %973 = vst.msk [vmem:[#allocation2 + $0x6c] sm:$0xff] %vm963, %v934
    %974 = vst.msk [vmem:[#allocation2 + $0x7c] sm:$0xff] %vm963, %v936
    %975 = vst.msk [vmem:[#allocation2 + $0x84] sm:$0xff] %vm963, %v938
    %976 = vst.msk [vmem:[#allocation2 + $0x94] sm:$0xff] %vm963, %v940
    %977 = vst.msk [vmem:[#allocation2 + $0x9c] sm:$0xff] %vm963, %v942
    %978 = vst.msk [vmem:[#allocation2 + $0xac] sm:$0xff] %vm963, %v944
    %979 = vst.msk [vmem:[#allocation2 + $0xb4] sm:$0xff] %vm963, %v946
    %980 = vrot.lane.b32.xlu0 %v544, 120
    %v981 = vpop.permute.xlu0 %980
    %982 = vrot.lane.b32.xlu0 %v545, 120
    %v983 = vpop.permute.xlu0 %982
    %984 = vrot.lane.b32.xlu0 %v546, 120
    %v985 = vpop.permute.xlu0 %984
    %986 = vrot.lane.b32.xlu0 %v547, 120
    %v987 = vpop.permute.xlu0 %986
    %988 = vrot.lane.b32.xlu0 %v548, 120
    %v989 = vpop.permute.xlu0 %988
    %990 = vrot.lane.b32.xlu0 %v549, 120
    %v991 = vpop.permute.xlu0 %990
    %992 = vrot.lane.b32.xlu0 %v550, 120
    %v993 = vpop.permute.xlu0 %992
    %994 = vrot.lane.b32.xlu0 %v551, 120
    %v995 = vpop.permute.xlu0 %994
    %996 = vrot.lane.b32.xlu0 %v552, 120
    %v997 = vpop.permute.xlu0 %996
    %998 = vrot.lane.b32.xlu0 %v553, 120
    %v999 = vpop.permute.xlu0 %998
    %1000 = vrot.lane.b32.xlu0 %v554, 120
    %v1001 = vpop.permute.xlu0 %1000
    %1002 = vrot.lane.b32.xlu0 %v555, 120
    %v1003 = vpop.permute.xlu0 %1002
    %1004 = vrot.lane.b32.xlu0 %v556, 120
    %v1005 = vpop.permute.xlu0 %1004
    %1006 = vrot.lane.b32.xlu0 %v557, 120
    %v1007 = vpop.permute.xlu0 %1006
    %1008 = vrot.lane.b32.xlu0 %v558, 120
    %v1009 = vpop.permute.xlu0 %1008
    %1010 = vrot.lane.b32.xlu0 %v559, 120
    %v1011 = vpop.permute.xlu0 %1010
    %vm1028 = vcmask 7168
    %1029 = vst.msk [vmem:[#allocation2 + $0x4] sm:$0xff] %vm1028, %v981
    %1030 = vst.msk [vmem:[#allocation2 + $0xc] sm:$0xff] %vm1028, %v983
    %1031 = vst.msk [vmem:[#allocation2 + $0x1c] sm:$0xff] %vm1028, %v985
    %1032 = vst.msk [vmem:[#allocation2 + $0x24] sm:$0xff] %vm1028, %v987
    %1033 = vst.msk [vmem:[#allocation2 + $0x34] sm:$0xff] %vm1028, %v989
    %1034 = vst.msk [vmem:[#allocation2 + $0x3c] sm:$0xff] %vm1028, %v991
    %1035 = vst.msk [vmem:[#allocation2 + $0x4c] sm:$0xff] %vm1028, %v993
    %1036 = vst.msk [vmem:[#allocation2 + $0x54] sm:$0xff] %vm1028, %v995
    %1037 = vst.msk [vmem:[#allocation2 + $0x64] sm:$0xff] %vm1028, %v997
    %1038 = vst.msk [vmem:[#allocation2 + $0x6c] sm:$0xff] %vm1028, %v999
    %1039 = vst.msk [vmem:[#allocation2 + $0x7c] sm:$0xff] %vm1028, %v1001
    %1040 = vst.msk [vmem:[#allocation2 + $0x84] sm:$0xff] %vm1028, %v1003
    %1041 = vst.msk [vmem:[#allocation2 + $0x94] sm:$0xff] %vm1028, %v1005
    %1042 = vst.msk [vmem:[#allocation2 + $0x9c] sm:$0xff] %vm1028, %v1007
    %1043 = vst.msk [vmem:[#allocation2 + $0xac] sm:$0xff] %vm1028, %v1009
    %1044 = vst.msk [vmem:[#allocation2 + $0xb4] sm:$0xff] %vm1028, %v1011
    %1045 = vrot.lane.b32.xlu0 %v544, 8
    %v1046 = vpop.permute.xlu0 %1045
    %1047 = vrot.lane.b32.xlu0 %v545, 8
    %v1048 = vpop.permute.xlu0 %1047
    %1049 = vrot.lane.b32.xlu0 %v546, 8
    %v1050 = vpop.permute.xlu0 %1049
    %1051 = vrot.lane.b32.xlu0 %v547, 8
    %v1052 = vpop.permute.xlu0 %1051
    %1053 = vrot.lane.b32.xlu0 %v548, 8
    %v1054 = vpop.permute.xlu0 %1053
    %1055 = vrot.lane.b32.xlu0 %v549, 8
    %v1056 = vpop.permute.xlu0 %1055
    %1057 = vrot.lane.b32.xlu0 %v550, 8
    %v1058 = vpop.permute.xlu0 %1057
    %1059 = vrot.lane.b32.xlu0 %v551, 8
    %v1060 = vpop.permute.xlu0 %1059
    %1061 = vrot.lane.b32.xlu0 %v552, 8
    %v1062 = vpop.permute.xlu0 %1061
    %1063 = vrot.lane.b32.xlu0 %v553, 8
    %v1064 = vpop.permute.xlu0 %1063
    %1065 = vrot.lane.b32.xlu0 %v554, 8
    %v1066 = vpop.permute.xlu0 %1065
    %1067 = vrot.lane.b32.xlu0 %v555, 8
    %v1068 = vpop.permute.xlu0 %1067
    %1069 = vrot.lane.b32.xlu0 %v556, 8
    %v1070 = vpop.permute.xlu0 %1069
    %1071 = vrot.lane.b32.xlu0 %v557, 8
    %v1072 = vpop.permute.xlu0 %1071
    %1073 = vrot.lane.b32.xlu0 %v558, 8
    %v1074 = vpop.permute.xlu0 %1073
    %1075 = vrot.lane.b32.xlu0 %v559, 8
    %v1076 = vpop.permute.xlu0 %1075
    %vm1093 = vcmask 195768
    %1094 = vst.msk [vmem:[#allocation2 + $0x4] sm:$0xff] %vm1093, %v1046
    %1095 = vst.msk [vmem:[#allocation2 + $0xc] sm:$0xff] %vm1093, %v1048
    %1096 = vst.msk [vmem:[#allocation2 + $0x1c] sm:$0xff] %vm1093, %v1050
    %1097 = vst.msk [vmem:[#allocation2 + $0x24] sm:$0xff] %vm1093, %v1052
    %1098 = vst.msk [vmem:[#allocation2 + $0x34] sm:$0xff] %vm1093, %v1054
    %1099 = vst.msk [vmem:[#allocation2 + $0x3c] sm:$0xff] %vm1093, %v1056
    %1100 = vst.msk [vmem:[#allocation2 + $0x4c] sm:$0xff] %vm1093, %v1058
    %1101 = vst.msk [vmem:[#allocation2 + $0x54] sm:$0xff] %vm1093, %v1060
    %1102 = vst.msk [vmem:[#allocation2 + $0x64] sm:$0xff] %vm1093, %v1062
    %1103 = vst.msk [vmem:[#allocation2 + $0x6c] sm:$0xff] %vm1093, %v1064
    %1104 = vst.msk [vmem:[#allocation2 + $0x7c] sm:$0xff] %vm1093, %v1066
    %1105 = vst.msk [vmem:[#allocation2 + $0x84] sm:$0xff] %vm1093, %v1068
    %1106 = vst.msk [vmem:[#allocation2 + $0x94] sm:$0xff] %vm1093, %v1070
    %1107 = vst.msk [vmem:[#allocation2 + $0x9c] sm:$0xff] %vm1093, %v1072
    %1108 = vst.msk [vmem:[#allocation2 + $0xac] sm:$0xff] %vm1093, %v1074
    %1109 = vst.msk [vmem:[#allocation2 + $0xb4] sm:$0xff] %vm1093, %v1076
    %v1110 = vld [vmem:[#allocation2 + $0x4] sm:$0xff]
    %v1111 = vld [vmem:[#allocation2 + $0xc] sm:$0xff]
    %v1112 = vld [vmem:[#allocation2 + $0x1c] sm:$0xff]
    %v1113 = vld [vmem:[#allocation2 + $0x24] sm:$0xff]
    %v1114 = vld [vmem:[#allocation2 + $0x34] sm:$0xff]
    %v1115 = vld [vmem:[#allocation2 + $0x3c] sm:$0xff]
    %v1116 = vld [vmem:[#allocation2 + $0x4c] sm:$0xff]
    %v1117 = vld [vmem:[#allocation2 + $0x54] sm:$0xff]
    %v1118 = vld [vmem:[#allocation2 + $0x64] sm:$0xff]
    %v1119 = vld [vmem:[#allocation2 + $0x6c] sm:$0xff]
    %v1120 = vld [vmem:[#allocation2 + $0x7c] sm:$0xff]
    %v1121 = vld [vmem:[#allocation2 + $0x84] sm:$0xff]
    %v1122 = vld [vmem:[#allocation2 + $0x94] sm:$0xff]
    %v1123 = vld [vmem:[#allocation2 + $0x9c] sm:$0xff]
    %v1124 = vld [vmem:[#allocation2 + $0xac] sm:$0xff]
    %v1125 = vld [vmem:[#allocation2 + $0xb4] sm:$0xff]
    %v1126 = vmul.f32 %v1110, 0.014839454
    %v1127 = vmul.f32 %v1111, 0.014839454
    %v1128 = vmul.f32 %v1112, 0.014839454
    %v1129 = vmul.f32 %v1113, 0.014839454
    %v1130 = vmul.f32 %v1114, 0.014839454
    %v1131 = vmul.f32 %v1115, 0.014839454
    %v1132 = vmul.f32 %v1116, 0.014839454
    %v1133 = vmul.f32 %v1117, 0.014839454
    %v1134 = vmul.f32 %v1118, 0.014839454
    %v1135 = vmul.f32 %v1119, 0.014839454
    %v1136 = vmul.f32 %v1120, 0.014839454
    %v1137 = vmul.f32 %v1121, 0.014839454
    %v1138 = vmul.f32 %v1122, 0.014839454
    %v1139 = vmul.f32 %v1123, 0.014839454
    %v1140 = vmul.f32 %v1124, 0.014839454
    %v1141 = vmul.f32 %v1125, 0.014839454
    %v1142 = vadd.f32 %v1126, 0.0
    %v1143 = vadd.f32 %v1127, 0.0
    %v1144 = vadd.f32 %v1128, 0.0
    %v1145 = vadd.f32 %v1129, 0.0
    %v1146 = vadd.f32 %v1130, 0.0
    %v1147 = vadd.f32 %v1131, 0.0
    %v1148 = vadd.f32 %v1132, 0.0
    %v1149 = vadd.f32 %v1133, 0.0
    %v1150 = vadd.f32 %v1134, 0.0
    %v1151 = vadd.f32 %v1135, 0.0
    %v1152 = vadd.f32 %v1136, 0.0
    %v1153 = vadd.f32 %v1137, 0.0
    %v1154 = vadd.f32 %v1138, 0.0
    %v1155 = vadd.f32 %v1139, 0.0
    %v1156 = vadd.f32 %v1140, 0.0
    %v1157 = vadd.f32 %v1141, 0.0
    %v1158 = vmul.f32 %v1110, 0.04981729
    %v1159 = vmul.f32 %v1111, 0.04981729
    %v1160 = vmul.f32 %v1112, 0.04981729
    %v1161 = vmul.f32 %v1113, 0.04981729
    %v1162 = vmul.f32 %v1114, 0.04981729
    %v1163 = vmul.f32 %v1115, 0.04981729
    %v1164 = vmul.f32 %v1116, 0.04981729
    %v1165 = vmul.f32 %v1117, 0.04981729
    %v1166 = vmul.f32 %v1118, 0.04981729
    %v1167 = vmul.f32 %v1119, 0.04981729
    %v1168 = vmul.f32 %v1120, 0.04981729
    %v1169 = vmul.f32 %v1121, 0.04981729
    %v1170 = vmul.f32 %v1122, 0.04981729
    %v1171 = vmul.f32 %v1123, 0.04981729
    %v1172 = vmul.f32 %v1124, 0.04981729
    %v1173 = vmul.f32 %v1125, 0.04981729
    %1190 = vrot.lane.b32.xlu0 %v1158, 127
    %v1191 = vpop.permute.xlu0 %1190
    %1192 = vrot.lane.b32.xlu0 %v1159, 127
    %v1193 = vpop.permute.xlu0 %1192
    %1194 = vrot.lane.b32.xlu0 %v1160, 127
    %v1195 = vpop.permute.xlu0 %1194
    %1196 = vrot.lane.b32.xlu0 %v1161, 127
    %v1197 = vpop.permute.xlu0 %1196
    %1198 = vrot.lane.b32.xlu0 %v1162, 127
    %v1199 = vpop.permute.xlu0 %1198
    %1200 = vrot.lane.b32.xlu0 %v1163, 127
    %v1201 = vpop.permute.xlu0 %1200
    %1202 = vrot.lane.b32.xlu0 %v1164, 127
    %v1203 = vpop.permute.xlu0 %1202
    %1204 = vrot.lane.b32.xlu0 %v1165, 127
    %v1205 = vpop.permute.xlu0 %1204
    %1206 = vrot.lane.b32.xlu0 %v1166, 127
    %v1207 = vpop.permute.xlu0 %1206
    %1208 = vrot.lane.b32.xlu0 %v1167, 127
    %v1209 = vpop.permute.xlu0 %1208
    %1210 = vrot.lane.b32.xlu0 %v1168, 127
    %v1211 = vpop.permute.xlu0 %1210
    %1212 = vrot.lane.b32.xlu0 %v1169, 127
    %v1213 = vpop.permute.xlu0 %1212
    %1214 = vrot.lane.b32.xlu0 %v1170, 127
    %v1215 = vpop.permute.xlu0 %1214
    %1216 = vrot.lane.b32.xlu0 %v1171, 127
    %v1217 = vpop.permute.xlu0 %1216
    %1218 = vrot.lane.b32.xlu0 %v1172, 127
    %v1219 = vpop.permute.xlu0 %1218
    %1220 = vrot.lane.b32.xlu0 %v1173, 127
    %v1221 = vpop.permute.xlu0 %1220
    %v1238 = vadd.f32 %v1142, %v1191
    %v1239 = vadd.f32 %v1143, %v1193
    %v1240 = vadd.f32 %v1144, %v1195
    %v1241 = vadd.f32 %v1145, %v1197
    %v1242 = vadd.f32 %v1146, %v1199
    %v1243 = vadd.f32 %v1147, %v1201
    %v1244 = vadd.f32 %v1148, %v1203
    %v1245 = vadd.f32 %v1149, %v1205
    %v1246 = vadd.f32 %v1150, %v1207
    %v1247 = vadd.f32 %v1151, %v1209
    %v1248 = vadd.f32 %v1152, %v1211
    %v1249 = vadd.f32 %v1153, %v1213
    %v1250 = vadd.f32 %v1154, %v1215
    %v1251 = vadd.f32 %v1155, %v1217
    %v1252 = vadd.f32 %v1156, %v1219
    %v1253 = vadd.f32 %v1157, %v1221
    %v1254 = vmul.f32 %v1110, 0.11832251
    %v1255 = vmul.f32 %v1111, 0.11832251
    %v1256 = vmul.f32 %v1112, 0.11832251
    %v1257 = vmul.f32 %v1113, 0.11832251
    %v1258 = vmul.f32 %v1114, 0.11832251
    %v1259 = vmul.f32 %v1115, 0.11832251
    %v1260 = vmul.f32 %v1116, 0.11832251
    %v1261 = vmul.f32 %v1117, 0.11832251
    %v1262 = vmul.f32 %v1118, 0.11832251
    %v1263 = vmul.f32 %v1119, 0.11832251
    %v1264 = vmul.f32 %v1120, 0.11832251
    %v1265 = vmul.f32 %v1121, 0.11832251
    %v1266 = vmul.f32 %v1122, 0.11832251
    %v1267 = vmul.f32 %v1123, 0.11832251
    %v1268 = vmul.f32 %v1124, 0.11832251
    %v1269 = vmul.f32 %v1125, 0.11832251
    %1286 = vrot.lane.b32.xlu0 %v1254, 126
    %v1287 = vpop.permute.xlu0 %1286
    %1288 = vrot.lane.b32.xlu0 %v1255, 126
    %v1289 = vpop.permute.xlu0 %1288
    %1290 = vrot.lane.b32.xlu0 %v1256, 126
    %v1291 = vpop.permute.xlu0 %1290
    %1292 = vrot.lane.b32.xlu0 %v1257, 126
    %v1293 = vpop.permute.xlu0 %1292
    %1294 = vrot.lane.b32.xlu0 %v1258, 126
    %v1295 = vpop.permute.xlu0 %1294
    %1296 = vrot.lane.b32.xlu0 %v1259, 126
    %v1297 = vpop.permute.xlu0 %1296
    %1298 = vrot.lane.b32.xlu0 %v1260, 126
    %v1299 = vpop.permute.xlu0 %1298
    %1300 = vrot.lane.b32.xlu0 %v1261, 126
    %v1301 = vpop.permute.xlu0 %1300
    %1302 = vrot.lane.b32.xlu0 %v1262, 126
    %v1303 = vpop.permute.xlu0 %1302
    %1304 = vrot.lane.b32.xlu0 %v1263, 126
    %v1305 = vpop.permute.xlu0 %1304
    %1306 = vrot.lane.b32.xlu0 %v1264, 126
    %v1307 = vpop.permute.xlu0 %1306
    %1308 = vrot.lane.b32.xlu0 %v1265, 126
    %v1309 = vpop.permute.xlu0 %1308
    %1310 = vrot.lane.b32.xlu0 %v1266, 126
    %v1311 = vpop.permute.xlu0 %1310
    %1312 = vrot.lane.b32.xlu0 %v1267, 126
    %v1313 = vpop.permute.xlu0 %1312
    %1314 = vrot.lane.b32.xlu0 %v1268, 126
    %v1315 = vpop.permute.xlu0 %1314
    %1316 = vrot.lane.b32.xlu0 %v1269, 126
    %v1317 = vpop.permute.xlu0 %1316
    %v1334 = vadd.f32 %v1238, %v1287
    %v1335 = vadd.f32 %v1239, %v1289
    %v1336 = vadd.f32 %v1240, %v1291
    %v1337 = vadd.f32 %v1241, %v1293
    %v1338 = vadd.f32 %v1242, %v1295
    %v1339 = vadd.f32 %v1243, %v1297
    %v1340 = vadd.f32 %v1244, %v1299
    %v1341 = vadd.f32 %v1245, %v1301
    %v1342 = vadd.f32 %v1246, %v1303
    %v1343 = vadd.f32 %v1247, %v1305
    %v1344 = vadd.f32 %v1248, %v1307
    %v1345 = vadd.f32 %v1249, %v1309
    %v1346 = vadd.f32 %v1250, %v1311
    %v1347 = vadd.f32 %v1251, %v1313
    %v1348 = vadd.f32 %v1252, %v1315
    %v1349 = vadd.f32 %v1253, %v1317
    %v1350 = vmul.f32 %v1110, 0.198829
    %v1351 = vmul.f32 %v1111, 0.198829
    %v1352 = vmul.f32 %v1112, 0.198829
    %v1353 = vmul.f32 %v1113, 0.198829
    %v1354 = vmul.f32 %v1114, 0.198829
    %v1355 = vmul.f32 %v1115, 0.198829
    %v1356 = vmul.f32 %v1116, 0.198829
    %v1357 = vmul.f32 %v1117, 0.198829
    %v1358 = vmul.f32 %v1118, 0.198829
    %v1359 = vmul.f32 %v1119, 0.198829
    %v1360 = vmul.f32 %v1120, 0.198829
    %v1361 = vmul.f32 %v1121, 0.198829
    %v1362 = vmul.f32 %v1122, 0.198829
    %v1363 = vmul.f32 %v1123, 0.198829
    %v1364 = vmul.f32 %v1124, 0.198829
    %v1365 = vmul.f32 %v1125, 0.198829
    %1382 = vrot.lane.b32.xlu0 %v1350, 125
    %v1383 = vpop.permute.xlu0 %1382
    %1384 = vrot.lane.b32.xlu0 %v1351, 125
    %v1385 = vpop.permute.xlu0 %1384
    %1386 = vrot.lane.b32.xlu0 %v1352, 125
    %v1387 = vpop.permute.xlu0 %1386
    %1388 = vrot.lane.b32.xlu0 %v1353, 125
    %v1389 = vpop.permute.xlu0 %1388
    %1390 = vrot.lane.b32.xlu0 %v1354, 125
    %v1391 = vpop.permute.xlu0 %1390
    %1392 = vrot.lane.b32.xlu0 %v1355, 125
    %v1393 = vpop.permute.xlu0 %1392
    %1394 = vrot.lane.b32.xlu0 %v1356, 125
    %v1395 = vpop.permute.xlu0 %1394
    %1396 = vrot.lane.b32.xlu0 %v1357, 125
    %v1397 = vpop.permute.xlu0 %1396
    %1398 = vrot.lane.b32.xlu0 %v1358, 125
    %v1399 = vpop.permute.xlu0 %1398
    %1400 = vrot.lane.b32.xlu0 %v1359, 125
    %v1401 = vpop.permute.xlu0 %1400
    %1402 = vrot.lane.b32.xlu0 %v1360, 125
    %v1403 = vpop.permute.xlu0 %1402
    %1404 = vrot.lane.b32.xlu0 %v1361, 125
    %v1405 = vpop.permute.xlu0 %1404
    %1406 = vrot.lane.b32.xlu0 %v1362, 125
    %v1407 = vpop.permute.xlu0 %1406
    %1408 = vrot.lane.b32.xlu0 %v1363, 125
    %v1409 = vpop.permute.xlu0 %1408
    %1410 = vrot.lane.b32.xlu0 %v1364, 125
    %v1411 = vpop.permute.xlu0 %1410
    %1412 = vrot.lane.b32.xlu0 %v1365, 125
    %v1413 = vpop.permute.xlu0 %1412
    %v1430 = vadd.f32 %v1334, %v1383
    %v1431 = vadd.f32 %v1335, %v1385
    %v1432 = vadd.f32 %v1336, %v1387
    %v1433 = vadd.f32 %v1337, %v1389
    %v1434 = vadd.f32 %v1338, %v1391
    %v1435 = vadd.f32 %v1339, %v1393
    %v1436 = vadd.f32 %v1340, %v1395
    %v1437 = vadd.f32 %v1341, %v1397
    %v1438 = vadd.f32 %v1342, %v1399
    %v1439 = vadd.f32 %v1343, %v1401
    %v1440 = vadd.f32 %v1344, %v1403
    %v1441 = vadd.f32 %v1345, %v1405
    %v1442 = vadd.f32 %v1346, %v1407
    %v1443 = vadd.f32 %v1347, %v1409
    %v1444 = vadd.f32 %v1348, %v1411
    %v1445 = vadd.f32 %v1349, %v1413
    %v1446 = vmul.f32 %v1110, 0.23638351
    %v1447 = vmul.f32 %v1111, 0.23638351
    %v1448 = vmul.f32 %v1112, 0.23638351
    %v1449 = vmul.f32 %v1113, 0.23638351
    %v1450 = vmul.f32 %v1114, 0.23638351
    %v1451 = vmul.f32 %v1115, 0.23638351
    %v1452 = vmul.f32 %v1116, 0.23638351
    %v1453 = vmul.f32 %v1117, 0.23638351
    %v1454 = vmul.f32 %v1118, 0.23638351
    %v1455 = vmul.f32 %v1119, 0.23638351
    %v1456 = vmul.f32 %v1120, 0.23638351
    %v1457 = vmul.f32 %v1121, 0.23638351
    %v1458 = vmul.f32 %v1122, 0.23638351
    %v1459 = vmul.f32 %v1123, 0.23638351
    %v1460 = vmul.f32 %v1124, 0.23638351
    %v1461 = vmul.f32 %v1125, 0.23638351
    %1478 = vrot.lane.b32.xlu0 %v1446, 124
    %v1479 = vpop.permute.xlu0 %1478
    %1480 = vrot.lane.b32.xlu0 %v1447, 124
    %v1481 = vpop.permute.xlu0 %1480
    %1482 = vrot.lane.b32.xlu0 %v1448, 124
    %v1483 = vpop.permute.xlu0 %1482
    %1484 = vrot.lane.b32.xlu0 %v1449, 124
    %v1485 = vpop.permute.xlu0 %1484
    %1486 = vrot.lane.b32.xlu0 %v1450, 124
    %v1487 = vpop.permute.xlu0 %1486
    %1488 = vrot.lane.b32.xlu0 %v1451, 124
    %v1489 = vpop.permute.xlu0 %1488
    %1490 = vrot.lane.b32.xlu0 %v1452, 124
    %v1491 = vpop.permute.xlu0 %1490
    %1492 = vrot.lane.b32.xlu0 %v1453, 124
    %v1493 = vpop.permute.xlu0 %1492
    %1494 = vrot.lane.b32.xlu0 %v1454, 124
    %v1495 = vpop.permute.xlu0 %1494
    %1496 = vrot.lane.b32.xlu0 %v1455, 124
    %v1497 = vpop.permute.xlu0 %1496
    %1498 = vrot.lane.b32.xlu0 %v1456, 124
    %v1499 = vpop.permute.xlu0 %1498
    %1500 = vrot.lane.b32.xlu0 %v1457, 124
    %v1501 = vpop.permute.xlu0 %1500
    %1502 = vrot.lane.b32.xlu0 %v1458, 124
    %v1503 = vpop.permute.xlu0 %1502
    %1504 = vrot.lane.b32.xlu0 %v1459, 124
    %v1505 = vpop.permute.xlu0 %1504
    %1506 = vrot.lane.b32.xlu0 %v1460, 124
    %v1507 = vpop.permute.xlu0 %1506
    %1508 = vrot.lane.b32.xlu0 %v1461, 124
    %v1509 = vpop.permute.xlu0 %1508
    %v1526 = vadd.f32 %v1430, %v1479
    %v1527 = vadd.f32 %v1431, %v1481
    %v1528 = vadd.f32 %v1432, %v1483
    %v1529 = vadd.f32 %v1433, %v1485
    %v1530 = vadd.f32 %v1434, %v1487
    %v1531 = vadd.f32 %v1435, %v1489
    %v1532 = vadd.f32 %v1436, %v1491
    %v1533 = vadd.f32 %v1437, %v1493
    %v1534 = vadd.f32 %v1438, %v1495
    %v1535 = vadd.f32 %v1439, %v1497
    %v1536 = vadd.f32 %v1440, %v1499
    %v1537 = vadd.f32 %v1441, %v1501
    %v1538 = vadd.f32 %v1442, %v1503
    %v1539 = vadd.f32 %v1443, %v1505
    %v1540 = vadd.f32 %v1444, %v1507
    %v1541 = vadd.f32 %v1445, %v1509
    %1542 = vrot.lane.b32.xlu0 %v1350, 123
    %v1543 = vpop.permute.xlu0 %1542
    %1544 = vrot.lane.b32.xlu0 %v1351, 123
    %v1545 = vpop.permute.xlu0 %1544
    %1546 = vrot.lane.b32.xlu0 %v1352, 123
    %v1547 = vpop.permute.xlu0 %1546
    %1548 = vrot.lane.b32.xlu0 %v1353, 123
    %v1549 = vpop.permute.xlu0 %1548
    %1550 = vrot.lane.b32.xlu0 %v1354, 123
    %v1551 = vpop.permute.xlu0 %1550
    %1552 = vrot.lane.b32.xlu0 %v1355, 123
    %v1553 = vpop.permute.xlu0 %1552
    %1554 = vrot.lane.b32.xlu0 %v1356, 123
    %v1555 = vpop.permute.xlu0 %1554
    %1556 = vrot.lane.b32.xlu0 %v1357, 123
    %v1557 = vpop.permute.xlu0 %1556
    %1558 = vrot.lane.b32.xlu0 %v1358, 123
    %v1559 = vpop.permute.xlu0 %1558
    %1560 = vrot.lane.b32.xlu0 %v1359, 123
    %v1561 = vpop.permute.xlu0 %1560
    %1562 = vrot.lane.b32.xlu0 %v1360, 123
    %v1563 = vpop.permute.xlu0 %1562
    %1564 = vrot.lane.b32.xlu0 %v1361, 123
    %v1565 = vpop.permute.xlu0 %1564
    %1566 = vrot.lane.b32.xlu0 %v1362, 123
    %v1567 = vpop.permute.xlu0 %1566
    %1568 = vrot.lane.b32.xlu0 %v1363, 123
    %v1569 = vpop.permute.xlu0 %1568
    %1570 = vrot.lane.b32.xlu0 %v1364, 123
    %v1571 = vpop.permute.xlu0 %1570
    %1572 = vrot.lane.b32.xlu0 %v1365, 123
    %v1573 = vpop.permute.xlu0 %1572
    %v1590 = vadd.f32 %v1526, %v1543
    %v1591 = vadd.f32 %v1527, %v1545
    %v1592 = vadd.f32 %v1528, %v1547
    %v1593 = vadd.f32 %v1529, %v1549
    %v1594 = vadd.f32 %v1530, %v1551
    %v1595 = vadd.f32 %v1531, %v1553
    %v1596 = vadd.f32 %v1532, %v1555
    %v1597 = vadd.f32 %v1533, %v1557
    %v1598 = vadd.f32 %v1534, %v1559
    %v1599 = vadd.f32 %v1535, %v1561
    %v1600 = vadd.f32 %v1536, %v1563
    %v1601 = vadd.f32 %v1537, %v1565
    %v1602 = vadd.f32 %v1538, %v1567
    %v1603 = vadd.f32 %v1539, %v1569
    %v1604 = vadd.f32 %v1540, %v1571
    %v1605 = vadd.f32 %v1541, %v1573
    %1606 = vrot.lane.b32.xlu0 %v1254, 122
    %v1607 = vpop.permute.xlu0 %1606
    %1608 = vrot.lane.b32.xlu0 %v1255, 122
    %v1609 = vpop.permute.xlu0 %1608
    %1610 = vrot.lane.b32.xlu0 %v1256, 122
    %v1611 = vpop.permute.xlu0 %1610
    %1612 = vrot.lane.b32.xlu0 %v1257, 122
    %v1613 = vpop.permute.xlu0 %1612
    %1614 = vrot.lane.b32.xlu0 %v1258, 122
    %v1615 = vpop.permute.xlu0 %1614
    %1616 = vrot.lane.b32.xlu0 %v1259, 122
    %v1617 = vpop.permute.xlu0 %1616
    %1618 = vrot.lane.b32.xlu0 %v1260, 122
    %v1619 = vpop.permute.xlu0 %1618
    %1620 = vrot.lane.b32.xlu0 %v1261, 122
    %v1621 = vpop.permute.xlu0 %1620
    %1622 = vrot.lane.b32.xlu0 %v1262, 122
    %v1623 = vpop.permute.xlu0 %1622
    %1624 = vrot.lane.b32.xlu0 %v1263, 122
    %v1625 = vpop.permute.xlu0 %1624
    %1626 = vrot.lane.b32.xlu0 %v1264, 122
    %v1627 = vpop.permute.xlu0 %1626
    %1628 = vrot.lane.b32.xlu0 %v1265, 122
    %v1629 = vpop.permute.xlu0 %1628
    %1630 = vrot.lane.b32.xlu0 %v1266, 122
    %v1631 = vpop.permute.xlu0 %1630
    %1632 = vrot.lane.b32.xlu0 %v1267, 122
    %v1633 = vpop.permute.xlu0 %1632
    %1634 = vrot.lane.b32.xlu0 %v1268, 122
    %v1635 = vpop.permute.xlu0 %1634
    %1636 = vrot.lane.b32.xlu0 %v1269, 122
    %v1637 = vpop.permute.xlu0 %1636
    %v1654 = vadd.f32 %v1590, %v1607
    %v1655 = vadd.f32 %v1591, %v1609
    %v1656 = vadd.f32 %v1592, %v1611
    %v1657 = vadd.f32 %v1593, %v1613
    %v1658 = vadd.f32 %v1594, %v1615
    %v1659 = vadd.f32 %v1595, %v1617
    %v1660 = vadd.f32 %v1596, %v1619
    %v1661 = vadd.f32 %v1597, %v1621
    %v1662 = vadd.f32 %v1598, %v1623
    %v1663 = vadd.f32 %v1599, %v1625
    %v1664 = vadd.f32 %v1600, %v1627
    %v1665 = vadd.f32 %v1601, %v1629
    %v1666 = vadd.f32 %v1602, %v1631
    %v1667 = vadd.f32 %v1603, %v1633
    %v1668 = vadd.f32 %v1604, %v1635
    %v1669 = vadd.f32 %v1605, %v1637
    %1670 = vrot.lane.b32.xlu0 %v1158, 121
    %v1671 = vpop.permute.xlu0 %1670
    %1672 = vrot.lane.b32.xlu0 %v1159, 121
    %v1673 = vpop.permute.xlu0 %1672
    %1674 = vrot.lane.b32.xlu0 %v1160, 121
    %v1675 = vpop.permute.xlu0 %1674
    %1676 = vrot.lane.b32.xlu0 %v1161, 121
    %v1677 = vpop.permute.xlu0 %1676
    %1678 = vrot.lane.b32.xlu0 %v1162, 121
    %v1679 = vpop.permute.xlu0 %1678
    %1680 = vrot.lane.b32.xlu0 %v1163, 121
    %v1681 = vpop.permute.xlu0 %1680
    %1682 = vrot.lane.b32.xlu0 %v1164, 121
    %v1683 = vpop.permute.xlu0 %1682
    %1684 = vrot.lane.b32.xlu0 %v1165, 121
    %v1685 = vpop.permute.xlu0 %1684
    %1686 = vrot.lane.b32.xlu0 %v1166, 121
    %v1687 = vpop.permute.xlu0 %1686
    %1688 = vrot.lane.b32.xlu0 %v1167, 121
    %v1689 = vpop.permute.xlu0 %1688
    %1690 = vrot.lane.b32.xlu0 %v1168, 121
    %v1691 = vpop.permute.xlu0 %1690
    %1692 = vrot.lane.b32.xlu0 %v1169, 121
    %v1693 = vpop.permute.xlu0 %1692
    %1694 = vrot.lane.b32.xlu0 %v1170, 121
    %v1695 = vpop.permute.xlu0 %1694
    %1696 = vrot.lane.b32.xlu0 %v1171, 121
    %v1697 = vpop.permute.xlu0 %1696
    %1698 = vrot.lane.b32.xlu0 %v1172, 121
    %v1699 = vpop.permute.xlu0 %1698
    %1700 = vrot.lane.b32.xlu0 %v1173, 121
    %v1701 = vpop.permute.xlu0 %1700
    %v1718 = vadd.f32 %v1654, %v1671
    %v1719 = vadd.f32 %v1655, %v1673
    %v1720 = vadd.f32 %v1656, %v1675
    %v1721 = vadd.f32 %v1657, %v1677
    %v1722 = vadd.f32 %v1658, %v1679
    %v1723 = vadd.f32 %v1659, %v1681
    %v1724 = vadd.f32 %v1660, %v1683
    %v1725 = vadd.f32 %v1661, %v1685
    %v1726 = vadd.f32 %v1662, %v1687
    %v1727 = vadd.f32 %v1663, %v1689
    %v1728 = vadd.f32 %v1664, %v1691
    %v1729 = vadd.f32 %v1665, %v1693
    %v1730 = vadd.f32 %v1666, %v1695
    %v1731 = vadd.f32 %v1667, %v1697
    %v1732 = vadd.f32 %v1668, %v1699
    %v1733 = vadd.f32 %v1669, %v1701
    %1750 = vrot.lane.b32.xlu0 %v1126, 120
    %v1751 = vpop.permute.xlu0 %1750
    %1752 = vrot.lane.b32.xlu0 %v1127, 120
    %v1753 = vpop.permute.xlu0 %1752
    %1754 = vrot.lane.b32.xlu0 %v1128, 120
    %v1755 = vpop.permute.xlu0 %1754
    %1756 = vrot.lane.b32.xlu0 %v1129, 120
    %v1757 = vpop.permute.xlu0 %1756
    %1758 = vrot.lane.b32.xlu0 %v1130, 120
    %v1759 = vpop.permute.xlu0 %1758
    %1760 = vrot.lane.b32.xlu0 %v1131, 120
    %v1761 = vpop.permute.xlu0 %1760
    %1762 = vrot.lane.b32.xlu0 %v1132, 120
    %v1763 = vpop.permute.xlu0 %1762
    %1764 = vrot.lane.b32.xlu0 %v1133, 120
    %v1765 = vpop.permute.xlu0 %1764
    %1766 = vrot.lane.b32.xlu0 %v1134, 120
    %v1767 = vpop.permute.xlu0 %1766
    %1768 = vrot.lane.b32.xlu0 %v1135, 120
    %v1769 = vpop.permute.xlu0 %1768
    %1770 = vrot.lane.b32.xlu0 %v1136, 120
    %v1771 = vpop.permute.xlu0 %1770
    %1772 = vrot.lane.b32.xlu0 %v1137, 120
    %v1773 = vpop.permute.xlu0 %1772
    %1774 = vrot.lane.b32.xlu0 %v1138, 120
    %v1775 = vpop.permute.xlu0 %1774
    %1776 = vrot.lane.b32.xlu0 %v1139, 120
    %v1777 = vpop.permute.xlu0 %1776
    %1778 = vrot.lane.b32.xlu0 %v1140, 120
    %v1779 = vpop.permute.xlu0 %1778
    %1780 = vrot.lane.b32.xlu0 %v1141, 120
    %v1781 = vpop.permute.xlu0 %1780
    %v1798 = vadd.f32 %v1718, %v1751
    %v1799 = vadd.f32 %v1719, %v1753
    %v1800 = vadd.f32 %v1720, %v1755
    %v1801 = vadd.f32 %v1721, %v1757
    %v1802 = vadd.f32 %v1722, %v1759
    %v1803 = vadd.f32 %v1723, %v1761
    %v1804 = vadd.f32 %v1724, %v1763
    %v1805 = vadd.f32 %v1725, %v1765
    %v1806 = vadd.f32 %v1726, %v1767
    %v1807 = vadd.f32 %v1727, %v1769
    %v1808 = vadd.f32 %v1728, %v1771
    %v1809 = vadd.f32 %v1729, %v1773
    %v1810 = vadd.f32 %v1730, %v1775
    %v1811 = vadd.f32 %v1731, %v1777
    %v1812 = vadd.f32 %v1732, %v1779
    %v1813 = vadd.f32 %v1733, %v1781
    %1830 = vrot.lane.b32.xlu0 %v1798, 4
    %v1831 = vpop.permute.xlu0 %1830
    %1832 = vrot.lane.b32.xlu0 %v1799, 4
    %v1833 = vpop.permute.xlu0 %1832
    %1834 = vrot.lane.b32.xlu0 %v1800, 4
    %v1835 = vpop.permute.xlu0 %1834
    %1836 = vrot.lane.b32.xlu0 %v1801, 4
    %v1837 = vpop.permute.xlu0 %1836
    %1838 = vrot.lane.b32.xlu0 %v1802, 4
    %v1839 = vpop.permute.xlu0 %1838
    %1840 = vrot.lane.b32.xlu0 %v1803, 4
    %v1841 = vpop.permute.xlu0 %1840
    %1842 = vrot.lane.b32.xlu0 %v1804, 4
    %v1843 = vpop.permute.xlu0 %1842
    %1844 = vrot.lane.b32.xlu0 %v1805, 4
    %v1845 = vpop.permute.xlu0 %1844
    %1846 = vrot.lane.b32.xlu0 %v1806, 4
    %v1847 = vpop.permute.xlu0 %1846
    %1848 = vrot.lane.b32.xlu0 %v1807, 4
    %v1849 = vpop.permute.xlu0 %1848
    %1850 = vrot.lane.b32.xlu0 %v1808, 4
    %v1851 = vpop.permute.xlu0 %1850
    %1852 = vrot.lane.b32.xlu0 %v1809, 4
    %v1853 = vpop.permute.xlu0 %1852
    %1854 = vrot.lane.b32.xlu0 %v1810, 4
    %v1855 = vpop.permute.xlu0 %1854
    %1856 = vrot.lane.b32.xlu0 %v1811, 4
    %v1857 = vpop.permute.xlu0 %1856
    %1858 = vrot.lane.b32.xlu0 %v1812, 4
    %v1859 = vpop.permute.xlu0 %1858
    %1860 = vrot.lane.b32.xlu0 %v1813, 4
    %v1861 = vpop.permute.xlu0 %1860
    %1878 = vst.msk [vmem:[#allocation2 + $0x4] sm:$0xff] %vm207, %v1831
    %1879 = vst.msk [vmem:[#allocation2 + $0xc] sm:$0xff] %vm207, %v1833
    %1880 = vst.msk [vmem:[#allocation2 + $0x1c] sm:$0xff] %vm207, %v1835
    %1881 = vst.msk [vmem:[#allocation2 + $0x24] sm:$0xff] %vm207, %v1837
    %1882 = vst.msk [vmem:[#allocation2 + $0x34] sm:$0xff] %vm207, %v1839
    %1883 = vst.msk [vmem:[#allocation2 + $0x3c] sm:$0xff] %vm207, %v1841
    %1884 = vst.msk [vmem:[#allocation2 + $0x4c] sm:$0xff] %vm207, %v1843
    %1885 = vst.msk [vmem:[#allocation2 + $0x54] sm:$0xff] %vm207, %v1845
    %1886 = vst.msk [vmem:[#allocation2 + $0x64] sm:$0xff] %vm207, %v1847
    %1887 = vst.msk [vmem:[#allocation2 + $0x6c] sm:$0xff] %vm207, %v1849
    %1888 = vst.msk [vmem:[#allocation2 + $0x7c] sm:$0xff] %vm207, %v1851
    %1889 = vst.msk [vmem:[#allocation2 + $0x84] sm:$0xff] %vm207, %v1853
    %1890 = vst.msk [vmem:[#allocation2 + $0x94] sm:$0xff] %vm207, %v1855
    %1891 = vst.msk [vmem:[#allocation2 + $0x9c] sm:$0xff] %vm207, %v1857
    %1892 = vst.msk [vmem:[#allocation2 + $0xac] sm:$0xff] %vm207, %v1859
    %1893 = vst.msk [vmem:[#allocation2 + $0xb4] sm:$0xff] %vm207, %v1861
    %vm1894 = vcmask 156705
    %1895 = vst.msk [vmem:[#allocation2 + $0x2] sm:$0x2] %vm1894, %v1831
    %1896 = vst.msk [vmem:[#allocation2 + $0x1a] sm:$0x2] %vm1894, %v1835
    %1897 = vst.msk [vmem:[#allocation2 + $0x32] sm:$0x2] %vm1894, %v1839
    %1898 = vst.msk [vmem:[#allocation2 + $0x4a] sm:$0x2] %vm1894, %v1843
    %1899 = vst.msk [vmem:[#allocation2 + $0x62] sm:$0x2] %vm1894, %v1847
    %1900 = vst.msk [vmem:[#allocation2 + $0x7a] sm:$0x2] %vm1894, %v1851
    %1901 = vst.msk [vmem:[#allocation2 + $0x92] sm:$0x2] %vm1894, %v1855
    %1902 = vst.msk [vmem:[#allocation2 + $0xaa] sm:$0x2] %vm1894, %v1859
    %vm1903 = vcmask 161830
    %1904 = vst.msk [vmem:[#allocation2 + $0xe] sm:$0x40] %vm1903, %v1833
    %1905 = vst.msk [vmem:[#allocation2 + $0x26] sm:$0x40] %vm1903, %v1837
    %1906 = vst.msk [vmem:[#allocation2 + $0x3e] sm:$0x40] %vm1903, %v1841
    %1907 = vst.msk [vmem:[#allocation2 + $0x56] sm:$0x40] %vm1903, %v1845
    %1908 = vst.msk [vmem:[#allocation2 + $0x6e] sm:$0x40] %vm1903, %v1849
    %1909 = vst.msk [vmem:[#allocation2 + $0x86] sm:$0x40] %vm1903, %v1853
    %1910 = vst.msk [vmem:[#allocation2 + $0x9e] sm:$0x40] %vm1903, %v1857
    %1911 = vst.msk [vmem:[#allocation2 + $0xb6] sm:$0x40] %vm1903, %v1861
    %vm1912 = vcmask 157730
    %1913 = vst.msk [vmem:[#allocation2] sm:$0x4] %vm1912, %v1831
    %1914 = vst.msk [vmem:[#allocation2 + $0x18] sm:$0x4] %vm1912, %v1835
    %1915 = vst.msk [vmem:[#allocation2 + $0x30] sm:$0x4] %vm1912, %v1839
    %1916 = vst.msk [vmem:[#allocation2 + $0x48] sm:$0x4] %vm1912, %v1843
    %1917 = vst.msk [vmem:[#allocation2 + $0x60] sm:$0x4] %vm1912, %v1847
    %1918 = vst.msk [vmem:[#allocation2 + $0x78] sm:$0x4] %vm1912, %v1851
    %1919 = vst.msk [vmem:[#allocation2 + $0x90] sm:$0x4] %vm1912, %v1855
    %1920 = vst.msk [vmem:[#allocation2 + $0xa8] sm:$0x4] %vm1912, %v1859
    %vm1921 = vcmask 160805
    %1922 = vst.msk [vmem:[#allocation2 + $0x10] sm:$0x20] %vm1921, %v1833
    %1923 = vst.msk [vmem:[#allocation2 + $0x28] sm:$0x20] %vm1921, %v1837
    %1924 = vst.msk [vmem:[#allocation2 + $0x40] sm:$0x20] %vm1921, %v1841
    %1925 = vst.msk [vmem:[#allocation2 + $0x58] sm:$0x20] %vm1921, %v1845
    %1926 = vst.msk [vmem:[#allocation2 + $0x70] sm:$0x20] %vm1921, %v1849
    %1927 = vst.msk [vmem:[#allocation2 + $0x88] sm:$0x20] %vm1921, %v1853
    %1928 = vst.msk [vmem:[#allocation2 + $0xa0] sm:$0x20] %vm1921, %v1857
    %1929 = vst.msk [vmem:[#allocation2 + $0xb8] sm:$0x20] %vm1921, %v1861
    %vm1930 = vcmask 158755
    %1931 = vst.msk [vmem:[#allocation2 - $0x2] sm:$0x8] %vm1930, %v1831
    %1932 = vst.msk [vmem:[#allocation2 + $0x16] sm:$0x8] %vm1930, %v1835
    %1933 = vst.msk [vmem:[#allocation2 + $0x2e] sm:$0x8] %vm1930, %v1839
    %1934 = vst.msk [vmem:[#allocation2 + $0x46] sm:$0x8] %vm1930, %v1843
    %1935 = vst.msk [vmem:[#allocation2 + $0x5e] sm:$0x8] %vm1930, %v1847
    %1936 = vst.msk [vmem:[#allocation2 + $0x76] sm:$0x8] %vm1930, %v1851
    %1937 = vst.msk [vmem:[#allocation2 + $0x8e] sm:$0x8] %vm1930, %v1855
    %1938 = vst.msk [vmem:[#allocation2 + $0xa6] sm:$0x8] %vm1930, %v1859
    %vm1939 = vcmask 159780
    %1940 = vst.msk [vmem:[#allocation2 + $0x12] sm:$0x10] %vm1939, %v1833
    %1941 = vst.msk [vmem:[#allocation2 + $0x2a] sm:$0x10] %vm1939, %v1837
    %1942 = vst.msk [vmem:[#allocation2 + $0x42] sm:$0x10] %vm1939, %v1841
    %1943 = vst.msk [vmem:[#allocation2 + $0x5a] sm:$0x10] %vm1939, %v1845
    %1944 = vst.msk [vmem:[#allocation2 + $0x72] sm:$0x10] %vm1939, %v1849
    %1945 = vst.msk [vmem:[#allocation2 + $0x8a] sm:$0x10] %vm1939, %v1853
    %1946 = vst.msk [vmem:[#allocation2 + $0xa2] sm:$0x10] %vm1939, %v1857
    %1947 = vst.msk [vmem:[#allocation2 + $0xba] sm:$0x10] %vm1939, %v1861
    %1948 = vst.msk [vmem:[#allocation2 - $0x4] sm:$0x10] %vm1939, %v1831
    %1949 = vst.msk [vmem:[#allocation2 + $0x14] sm:$0x10] %vm1939, %v1835
    %1950 = vst.msk [vmem:[#allocation2 + $0x2c] sm:$0x10] %vm1939, %v1839
    %1951 = vst.msk [vmem:[#allocation2 + $0x44] sm:$0x10] %vm1939, %v1843
    %1952 = vst.msk [vmem:[#allocation2 + $0x5c] sm:$0x10] %vm1939, %v1847
    %1953 = vst.msk [vmem:[#allocation2 + $0x74] sm:$0x10] %vm1939, %v1851
    %1954 = vst.msk [vmem:[#allocation2 + $0x8c] sm:$0x10] %vm1939, %v1855
    %1955 = vst.msk [vmem:[#allocation2 + $0xa4] sm:$0x10] %vm1939, %v1859
    %1956 = vst.msk [vmem:[#allocation2 + $0x14] sm:$0x8] %vm1930, %v1833
    %1957 = vst.msk [vmem:[#allocation2 + $0x2c] sm:$0x8] %vm1930, %v1837
    %1958 = vst.msk [vmem:[#allocation2 + $0x44] sm:$0x8] %vm1930, %v1841
    %1959 = vst.msk [vmem:[#allocation2 + $0x5c] sm:$0x8] %vm1930, %v1845
    %1960 = vst.msk [vmem:[#allocation2 + $0x74] sm:$0x8] %vm1930, %v1849
    %1961 = vst.msk [vmem:[#allocation2 + $0x8c] sm:$0x8] %vm1930, %v1853
    %1962 = vst.msk [vmem:[#allocation2 + $0xa4] sm:$0x8] %vm1930, %v1857
    %1963 = vst.msk [vmem:[#allocation2 + $0xbc] sm:$0x8] %vm1930, %v1861
    %v1964 = vld [vmem:[#allocation2] sm:$0xff]
    %v1965 = vld [vmem:[#allocation2 + $0x8] sm:$0xff]
    %v1966 = vld [vmem:[#allocation2 + $0x18] sm:$0xff]
    %v1967 = vld [vmem:[#allocation2 + $0x20] sm:$0xff]
    %v1968 = vld [vmem:[#allocation2 + $0x30] sm:$0xff]
    %v1969 = vld [vmem:[#allocation2 + $0x38] sm:$0xff]
    %v1970 = vld [vmem:[#allocation2 + $0x48] sm:$0xff]
    %v1971 = vld [vmem:[#allocation2 + $0x50] sm:$0xff]
    %v1972 = vld [vmem:[#allocation2 + $0x60] sm:$0xff]
    %v1973 = vld [vmem:[#allocation2 + $0x68] sm:$0xff]
    %v1974 = vld [vmem:[#allocation2 + $0x78] sm:$0xff]
    %v1975 = vld [vmem:[#allocation2 + $0x80] sm:$0xff]
    %v1976 = vld [vmem:[#allocation2 + $0x90] sm:$0xff]
    %v1977 = vld [vmem:[#allocation2 + $0x98] sm:$0xff]
    %v1978 = vld [vmem:[#allocation2 + $0xa8] sm:$0xff]
    %v1979 = vld [vmem:[#allocation2 + $0xb0] sm:$0xff]
    %v1980 = vmul.f32 %v1964, 0.014839454
    %v1981 = vmul.f32 %v1965, 0.014839454
    %v1982 = vmul.f32 %v1966, 0.014839454
    %v1983 = vmul.f32 %v1967, 0.014839454
    %v1984 = vmul.f32 %v1968, 0.014839454
    %v1985 = vmul.f32 %v1969, 0.014839454
    %v1986 = vmul.f32 %v1970, 0.014839454
    %v1987 = vmul.f32 %v1971, 0.014839454
    %v1988 = vmul.f32 %v1972, 0.014839454
    %v1989 = vmul.f32 %v1973, 0.014839454
    %v1990 = vmul.f32 %v1974, 0.014839454
    %v1991 = vmul.f32 %v1975, 0.014839454
    %v1992 = vmul.f32 %v1976, 0.014839454
    %v1993 = vmul.f32 %v1977, 0.014839454
    %v1994 = vmul.f32 %v1978, 0.014839454
    %v1995 = vmul.f32 %v1979, 0.014839454
    %v1996 = vadd.f32 %v1980, 0.0
    %v1997 = vadd.f32 %v1981, 0.0
    %v1998 = vadd.f32 %v1982, 0.0
    %v1999 = vadd.f32 %v1983, 0.0
    %v2000 = vadd.f32 %v1984, 0.0
    %v2001 = vadd.f32 %v1985, 0.0
    %v2002 = vadd.f32 %v1986, 0.0
    %v2003 = vadd.f32 %v1987, 0.0
    %v2004 = vadd.f32 %v1988, 0.0
    %v2005 = vadd.f32 %v1989, 0.0
    %v2006 = vadd.f32 %v1990, 0.0
    %v2007 = vadd.f32 %v1991, 0.0
    %v2008 = vadd.f32 %v1992, 0.0
    %v2009 = vadd.f32 %v1993, 0.0
    %v2010 = vadd.f32 %v1994, 0.0
    %v2011 = vadd.f32 %v1995, 0.0
    %v2012 = vld [vmem:[#allocation2 + $0x1] sm:$0xff]
    %v2013 = vld [vmem:[#allocation2 + $0x9] sm:$0xff]
    %v2014 = vld [vmem:[#allocation2 + $0x19] sm:$0xff]
    %v2015 = vld [vmem:[#allocation2 + $0x21] sm:$0xff]
    %v2016 = vld [vmem:[#allocation2 + $0x31] sm:$0xff]
    %v2017 = vld [vmem:[#allocation2 + $0x39] sm:$0xff]
    %v2018 = vld [vmem:[#allocation2 + $0x49] sm:$0xff]
    %v2019 = vld [vmem:[#allocation2 + $0x51] sm:$0xff]
    %v2020 = vld [vmem:[#allocation2 + $0x61] sm:$0xff]
    %v2021 = vld [vmem:[#allocation2 + $0x69] sm:$0xff]
    %v2022 = vld [vmem:[#allocation2 + $0x79] sm:$0xff]
    %v2023 = vld [vmem:[#allocation2 + $0x81] sm:$0xff]
    %v2024 = vld [vmem:[#allocation2 + $0x91] sm:$0xff]
    %v2025 = vld [vmem:[#allocation2 + $0x99] sm:$0xff]
    %v2026 = vld [vmem:[#allocation2 + $0xa9] sm:$0xff]
    %v2027 = vld [vmem:[#allocation2 + $0xb1] sm:$0xff]
    %v2028 = vmul.f32 %v2012, 0.04981729
    %v2029 = vmul.f32 %v2013, 0.04981729
    %v2030 = vmul.f32 %v2014, 0.04981729
    %v2031 = vmul.f32 %v2015, 0.04981729
    %v2032 = vmul.f32 %v2016, 0.04981729
    %v2033 = vmul.f32 %v2017, 0.04981729
    %v2034 = vmul.f32 %v2018, 0.04981729
    %v2035 = vmul.f32 %v2019, 0.04981729
    %v2036 = vmul.f32 %v2020, 0.04981729
    %v2037 = vmul.f32 %v2021, 0.04981729
    %v2038 = vmul.f32 %v2022, 0.04981729
    %v2039 = vmul.f32 %v2023, 0.04981729
    %v2040 = vmul.f32 %v2024, 0.04981729
    %v2041 = vmul.f32 %v2025, 0.04981729
    %v2042 = vmul.f32 %v2026, 0.04981729
    %v2043 = vmul.f32 %v2027, 0.04981729
    %v2044 = vadd.f32 %v1996, %v2028
    %v2045 = vadd.f32 %v1997, %v2029
    %v2046 = vadd.f32 %v1998, %v2030
    %v2047 = vadd.f32 %v1999, %v2031
    %v2048 = vadd.f32 %v2000, %v2032
    %v2049 = vadd.f32 %v2001, %v2033
    %v2050 = vadd.f32 %v2002, %v2034
    %v2051 = vadd.f32 %v2003, %v2035
    %v2052 = vadd.f32 %v2004, %v2036
    %v2053 = vadd.f32 %v2005, %v2037
    %v2054 = vadd.f32 %v2006, %v2038
    %v2055 = vadd.f32 %v2007, %v2039
    %v2056 = vadd.f32 %v2008, %v2040
    %v2057 = vadd.f32 %v2009, %v2041
    %v2058 = vadd.f32 %v2010, %v2042
    %v2059 = vadd.f32 %v2011, %v2043
    %v2060 = vld [vmem:[#allocation2 + $0x2] sm:$0xff]
    %v2061 = vld [vmem:[#allocation2 + $0xa] sm:$0xff]
    %v2062 = vld [vmem:[#allocation2 + $0x1a] sm:$0xff]
    %v2063 = vld [vmem:[#allocation2 + $0x22] sm:$0xff]
    %v2064 = vld [vmem:[#allocation2 + $0x32] sm:$0xff]
    %v2065 = vld [vmem:[#allocation2 + $0x3a] sm:$0xff]
    %v2066 = vld [vmem:[#allocation2 + $0x4a] sm:$0xff]
    %v2067 = vld [vmem:[#allocation2 + $0x52] sm:$0xff]
    %v2068 = vld [vmem:[#allocation2 + $0x62] sm:$0xff]
    %v2069 = vld [vmem:[#allocation2 + $0x6a] sm:$0xff]
    %v2070 = vld [vmem:[#allocation2 + $0x7a] sm:$0xff]
    %v2071 = vld [vmem:[#allocation2 + $0x82] sm:$0xff]
    %v2072 = vld [vmem:[#allocation2 + $0x92] sm:$0xff]
    %v2073 = vld [vmem:[#allocation2 + $0x9a] sm:$0xff]
    %v2074 = vld [vmem:[#allocation2 + $0xaa] sm:$0xff]
    %v2075 = vld [vmem:[#allocation2 + $0xb2] sm:$0xff]
    %v2076 = vmul.f32 %v2060, 0.11832251
    %v2077 = vmul.f32 %v2061, 0.11832251
    %v2078 = vmul.f32 %v2062, 0.11832251
    %v2079 = vmul.f32 %v2063, 0.11832251
    %v2080 = vmul.f32 %v2064, 0.11832251
    %v2081 = vmul.f32 %v2065, 0.11832251
    %v2082 = vmul.f32 %v2066, 0.11832251
    %v2083 = vmul.f32 %v2067, 0.11832251
    %v2084 = vmul.f32 %v2068, 0.11832251
    %v2085 = vmul.f32 %v2069, 0.11832251
    %v2086 = vmul.f32 %v2070, 0.11832251
    %v2087 = vmul.f32 %v2071, 0.11832251
    %v2088 = vmul.f32 %v2072, 0.11832251
    %v2089 = vmul.f32 %v2073, 0.11832251
    %v2090 = vmul.f32 %v2074, 0.11832251
    %v2091 = vmul.f32 %v2075, 0.11832251
    %v2092 = vadd.f32 %v2044, %v2076
    %v2093 = vadd.f32 %v2045, %v2077
    %v2094 = vadd.f32 %v2046, %v2078
    %v2095 = vadd.f32 %v2047, %v2079
    %v2096 = vadd.f32 %v2048, %v2080
    %v2097 = vadd.f32 %v2049, %v2081
    %v2098 = vadd.f32 %v2050, %v2082
    %v2099 = vadd.f32 %v2051, %v2083
    %v2100 = vadd.f32 %v2052, %v2084
    %v2101 = vadd.f32 %v2053, %v2085
    %v2102 = vadd.f32 %v2054, %v2086
    %v2103 = vadd.f32 %v2055, %v2087
    %v2104 = vadd.f32 %v2056, %v2088
    %v2105 = vadd.f32 %v2057, %v2089
    %v2106 = vadd.f32 %v2058, %v2090
    %v2107 = vadd.f32 %v2059, %v2091
    %v2108 = vld [vmem:[#allocation2 + $0x3] sm:$0xff]
    %v2109 = vld [vmem:[#allocation2 + $0xb] sm:$0xff]
    %v2110 = vld [vmem:[#allocation2 + $0x1b] sm:$0xff]
    %v2111 = vld [vmem:[#allocation2 + $0x23] sm:$0xff]
    %v2112 = vld [vmem:[#allocation2 + $0x33] sm:$0xff]
    %v2113 = vld [vmem:[#allocation2 + $0x3b] sm:$0xff]
    %v2114 = vld [vmem:[#allocation2 + $0x4b] sm:$0xff]
    %v2115 = vld [vmem:[#allocation2 + $0x53] sm:$0xff]
    %v2116 = vld [vmem:[#allocation2 + $0x63] sm:$0xff]
    %v2117 = vld [vmem:[#allocation2 + $0x6b] sm:$0xff]
    %v2118 = vld [vmem:[#allocation2 + $0x7b] sm:$0xff]
    %v2119 = vld [vmem:[#allocation2 + $0x83] sm:$0xff]
    %v2120 = vld [vmem:[#allocation2 + $0x93] sm:$0xff]
    %v2121 = vld [vmem:[#allocation2 + $0x9b] sm:$0xff]
    %v2122 = vld [vmem:[#allocation2 + $0xab] sm:$0xff]
    %v2123 = vld [vmem:[#allocation2 + $0xb3] sm:$0xff]
    %v2124 = vmul.f32 %v2108, 0.198829
    %v2125 = vmul.f32 %v2109, 0.198829
    %v2126 = vmul.f32 %v2110, 0.198829
    %v2127 = vmul.f32 %v2111, 0.198829
    %v2128 = vmul.f32 %v2112, 0.198829
    %v2129 = vmul.f32 %v2113, 0.198829
    %v2130 = vmul.f32 %v2114, 0.198829
    %v2131 = vmul.f32 %v2115, 0.198829
    %v2132 = vmul.f32 %v2116, 0.198829
    %v2133 = vmul.f32 %v2117, 0.198829
    %v2134 = vmul.f32 %v2118, 0.198829
    %v2135 = vmul.f32 %v2119, 0.198829
    %v2136 = vmul.f32 %v2120, 0.198829
    %v2137 = vmul.f32 %v2121, 0.198829
    %v2138 = vmul.f32 %v2122, 0.198829
    %v2139 = vmul.f32 %v2123, 0.198829
    %v2140 = vadd.f32 %v2092, %v2124
    %v2141 = vadd.f32 %v2093, %v2125
    %v2142 = vadd.f32 %v2094, %v2126
    %v2143 = vadd.f32 %v2095, %v2127
    %v2144 = vadd.f32 %v2096, %v2128
    %v2145 = vadd.f32 %v2097, %v2129
    %v2146 = vadd.f32 %v2098, %v2130
    %v2147 = vadd.f32 %v2099, %v2131
    %v2148 = vadd.f32 %v2100, %v2132
    %v2149 = vadd.f32 %v2101, %v2133
    %v2150 = vadd.f32 %v2102, %v2134
    %v2151 = vadd.f32 %v2103, %v2135
    %v2152 = vadd.f32 %v2104, %v2136
    %v2153 = vadd.f32 %v2105, %v2137
    %v2154 = vadd.f32 %v2106, %v2138
    %v2155 = vadd.f32 %v2107, %v2139
    %v2156 = vld [vmem:[#allocation2 + $0x4] sm:$0xff]
    %v2157 = vld [vmem:[#allocation2 + $0xc] sm:$0xff]
    %v2158 = vld [vmem:[#allocation2 + $0x1c] sm:$0xff]
    %v2159 = vld [vmem:[#allocation2 + $0x24] sm:$0xff]
    %v2160 = vld [vmem:[#allocation2 + $0x34] sm:$0xff]
    %v2161 = vld [vmem:[#allocation2 + $0x3c] sm:$0xff]
    %v2162 = vld [vmem:[#allocation2 + $0x4c] sm:$0xff]
    %v2163 = vld [vmem:[#allocation2 + $0x54] sm:$0xff]
    %v2164 = vld [vmem:[#allocation2 + $0x64] sm:$0xff]
    %v2165 = vld [vmem:[#allocation2 + $0x6c] sm:$0xff]
    %v2166 = vld [vmem:[#allocation2 + $0x7c] sm:$0xff]
    %v2167 = vld [vmem:[#allocation2 + $0x84] sm:$0xff]
    %v2168 = vld [vmem:[#allocation2 + $0x94] sm:$0xff]
    %v2169 = vld [vmem:[#allocation2 + $0x9c] sm:$0xff]
    %v2170 = vld [vmem:[#allocation2 + $0xac] sm:$0xff]
    %v2171 = vld [vmem:[#allocation2 + $0xb4] sm:$0xff]
    %v2172 = vmul.f32 %v2156, 0.23638351
    %v2173 = vmul.f32 %v2157, 0.23638351
    %v2174 = vmul.f32 %v2158, 0.23638351
    %v2175 = vmul.f32 %v2159, 0.23638351
    %v2176 = vmul.f32 %v2160, 0.23638351
    %v2177 = vmul.f32 %v2161, 0.23638351
    %v2178 = vmul.f32 %v2162, 0.23638351
    %v2179 = vmul.f32 %v2163, 0.23638351
    %v2180 = vmul.f32 %v2164, 0.23638351
    %v2181 = vmul.f32 %v2165, 0.23638351
    %v2182 = vmul.f32 %v2166, 0.23638351
    %v2183 = vmul.f32 %v2167, 0.23638351
    %v2184 = vmul.f32 %v2168, 0.23638351
    %v2185 = vmul.f32 %v2169, 0.23638351
    %v2186 = vmul.f32 %v2170, 0.23638351
    %v2187 = vmul.f32 %v2171, 0.23638351
    %v2188 = vadd.f32 %v2140, %v2172
    %v2189 = vadd.f32 %v2141, %v2173
    %v2190 = vadd.f32 %v2142, %v2174
    %v2191 = vadd.f32 %v2143, %v2175
    %v2192 = vadd.f32 %v2144, %v2176
    %v2193 = vadd.f32 %v2145, %v2177
    %v2194 = vadd.f32 %v2146, %v2178
    %v2195 = vadd.f32 %v2147, %v2179
    %v2196 = vadd.f32 %v2148, %v2180
    %v2197 = vadd.f32 %v2149, %v2181
    %v2198 = vadd.f32 %v2150, %v2182
    %v2199 = vadd.f32 %v2151, %v2183
    %v2200 = vadd.f32 %v2152, %v2184
    %v2201 = vadd.f32 %v2153, %v2185
    %v2202 = vadd.f32 %v2154, %v2186
    %v2203 = vadd.f32 %v2155, %v2187
    %v2204 = vld [vmem:[#allocation2 + $0x5] sm:$0xff]
    %v2205 = vld [vmem:[#allocation2 + $0xd] sm:$0xff]
    %v2206 = vld [vmem:[#allocation2 + $0x1d] sm:$0xff]
    %v2207 = vld [vmem:[#allocation2 + $0x25] sm:$0xff]
    %v2208 = vld [vmem:[#allocation2 + $0x35] sm:$0xff]
    %v2209 = vld [vmem:[#allocation2 + $0x3d] sm:$0xff]
    %v2210 = vld [vmem:[#allocation2 + $0x4d] sm:$0xff]
    %v2211 = vld [vmem:[#allocation2 + $0x55] sm:$0xff]
    %v2212 = vld [vmem:[#allocation2 + $0x65] sm:$0xff]
    %v2213 = vld [vmem:[#allocation2 + $0x6d] sm:$0xff]
    %v2214 = vld [vmem:[#allocation2 + $0x7d] sm:$0xff]
    %v2215 = vld [vmem:[#allocation2 + $0x85] sm:$0xff]
    %v2216 = vld [vmem:[#allocation2 + $0x95] sm:$0xff]
    %v2217 = vld [vmem:[#allocation2 + $0x9d] sm:$0xff]
    %v2218 = vld [vmem:[#allocation2 + $0xad] sm:$0xff]
    %v2219 = vld [vmem:[#allocation2 + $0xb5] sm:$0xff]
    %v2220 = vmul.f32 %v2204, 0.198829
    %v2221 = vmul.f32 %v2205, 0.198829
    %v2222 = vmul.f32 %v2206, 0.198829
    %v2223 = vmul.f32 %v2207, 0.198829
    %v2224 = vmul.f32 %v2208, 0.198829
    %v2225 = vmul.f32 %v2209, 0.198829
    %v2226 = vmul.f32 %v2210, 0.198829
    %v2227 = vmul.f32 %v2211, 0.198829
    %v2228 = vmul.f32 %v2212, 0.198829
    %v2229 = vmul.f32 %v2213, 0.198829
    %v2230 = vmul.f32 %v2214, 0.198829
    %v2231 = vmul.f32 %v2215, 0.198829
    %v2232 = vmul.f32 %v2216, 0.198829
    %v2233 = vmul.f32 %v2217, 0.198829
    %v2234 = vmul.f32 %v2218, 0.198829
    %v2235 = vmul.f32 %v2219, 0.198829
    %v2236 = vadd.f32 %v2188, %v2220
    %v2237 = vadd.f32 %v2189, %v2221
    %v2238 = vadd.f32 %v2190, %v2222
    %v2239 = vadd.f32 %v2191, %v2223
    %v2240 = vadd.f32 %v2192, %v2224
    %v2241 = vadd.f32 %v2193, %v2225
    %v2242 = vadd.f32 %v2194, %v2226
    %v2243 = vadd.f32 %v2195, %v2227
    %v2244 = vadd.f32 %v2196, %v2228
    %v2245 = vadd.f32 %v2197, %v2229
    %v2246 = vadd.f32 %v2198, %v2230
    %v2247 = vadd.f32 %v2199, %v2231
    %v2248 = vadd.f32 %v2200, %v2232
    %v2249 = vadd.f32 %v2201, %v2233
    %v2250 = vadd.f32 %v2202, %v2234
    %v2251 = vadd.f32 %v2203, %v2235
    %v2252 = vld [vmem:[#allocation2 + $0x6] sm:$0xff]
    %v2253 = vld [vmem:[#allocation2 + $0xe] sm:$0xff]
    %v2254 = vld [vmem:[#allocation2 + $0x1e] sm:$0xff]
    %v2255 = vld [vmem:[#allocation2 + $0x26] sm:$0xff]
    %v2256 = vld [vmem:[#allocation2 + $0x36] sm:$0xff]
    %v2257 = vld [vmem:[#allocation2 + $0x3e] sm:$0xff]
    %v2258 = vld [vmem:[#allocation2 + $0x4e] sm:$0xff]
    %v2259 = vld [vmem:[#allocation2 + $0x56] sm:$0xff]
    %v2260 = vld [vmem:[#allocation2 + $0x66] sm:$0xff]
    %v2261 = vld [vmem:[#allocation2 + $0x6e] sm:$0xff]
    %v2262 = vld [vmem:[#allocation2 + $0x7e] sm:$0xff]
    %v2263 = vld [vmem:[#allocation2 + $0x86] sm:$0xff]
    %v2264 = vld [vmem:[#allocation2 + $0x96] sm:$0xff]
    %v2265 = vld [vmem:[#allocation2 + $0x9e] sm:$0xff]
    %v2266 = vld [vmem:[#allocation2 + $0xae] sm:$0xff]
    %v2267 = vld [vmem:[#allocation2 + $0xb6] sm:$0xff]
    %v2268 = vmul.f32 %v2252, 0.11832251
    %v2269 = vmul.f32 %v2253, 0.11832251
    %v2270 = vmul.f32 %v2254, 0.11832251
    %v2271 = vmul.f32 %v2255, 0.11832251
    %v2272 = vmul.f32 %v2256, 0.11832251
    %v2273 = vmul.f32 %v2257, 0.11832251
    %v2274 = vmul.f32 %v2258, 0.11832251
    %v2275 = vmul.f32 %v2259, 0.11832251
    %v2276 = vmul.f32 %v2260, 0.11832251
    %v2277 = vmul.f32 %v2261, 0.11832251
    %v2278 = vmul.f32 %v2262, 0.11832251
    %v2279 = vmul.f32 %v2263, 0.11832251
    %v2280 = vmul.f32 %v2264, 0.11832251
    %v2281 = vmul.f32 %v2265, 0.11832251
    %v2282 = vmul.f32 %v2266, 0.11832251
    %v2283 = vmul.f32 %v2267, 0.11832251
    %v2284 = vadd.f32 %v2236, %v2268
    %v2285 = vadd.f32 %v2237, %v2269
    %v2286 = vadd.f32 %v2238, %v2270
    %v2287 = vadd.f32 %v2239, %v2271
    %v2288 = vadd.f32 %v2240, %v2272
    %v2289 = vadd.f32 %v2241, %v2273
    %v2290 = vadd.f32 %v2242, %v2274
    %v2291 = vadd.f32 %v2243, %v2275
    %v2292 = vadd.f32 %v2244, %v2276
    %v2293 = vadd.f32 %v2245, %v2277
    %v2294 = vadd.f32 %v2246, %v2278
    %v2295 = vadd.f32 %v2247, %v2279
    %v2296 = vadd.f32 %v2248, %v2280
    %v2297 = vadd.f32 %v2249, %v2281
    %v2298 = vadd.f32 %v2250, %v2282
    %v2299 = vadd.f32 %v2251, %v2283
    %v2300 = vld [vmem:[#allocation2 + $0x7] sm:$0xff]
    %v2301 = vld [vmem:[#allocation2 + $0xf] sm:$0xff]
    %v2302 = vld [vmem:[#allocation2 + $0x1f] sm:$0xff]
    %v2303 = vld [vmem:[#allocation2 + $0x27] sm:$0xff]
    %v2304 = vld [vmem:[#allocation2 + $0x37] sm:$0xff]
    %v2305 = vld [vmem:[#allocation2 + $0x3f] sm:$0xff]
    %v2306 = vld [vmem:[#allocation2 + $0x4f] sm:$0xff]
    %v2307 = vld [vmem:[#allocation2 + $0x57] sm:$0xff]
    %v2308 = vld [vmem:[#allocation2 + $0x67] sm:$0xff]
    %v2309 = vld [vmem:[#allocation2 + $0x6f] sm:$0xff]
    %v2310 = vld [vmem:[#allocation2 + $0x7f] sm:$0xff]
    %v2311 = vld [vmem:[#allocation2 + $0x87] sm:$0xff]
    %v2312 = vld [vmem:[#allocation2 + $0x97] sm:$0xff]
    %v2313 = vld [vmem:[#allocation2 + $0x9f] sm:$0xff]
    %v2314 = vld [vmem:[#allocation2 + $0xaf] sm:$0xff]
    %v2315 = vld [vmem:[#allocation2 + $0xb7] sm:$0xff]
    %v2316 = vmul.f32 %v2300, 0.04981729
    %v2317 = vmul.f32 %v2301, 0.04981729
    %v2318 = vmul.f32 %v2302, 0.04981729
    %v2319 = vmul.f32 %v2303, 0.04981729
    %v2320 = vmul.f32 %v2304, 0.04981729
    %v2321 = vmul.f32 %v2305, 0.04981729
    %v2322 = vmul.f32 %v2306, 0.04981729
    %v2323 = vmul.f32 %v2307, 0.04981729
    %v2324 = vmul.f32 %v2308, 0.04981729
    %v2325 = vmul.f32 %v2309, 0.04981729
    %v2326 = vmul.f32 %v2310, 0.04981729
    %v2327 = vmul.f32 %v2311, 0.04981729
    %v2328 = vmul.f32 %v2312, 0.04981729
    %v2329 = vmul.f32 %v2313, 0.04981729
    %v2330 = vmul.f32 %v2314, 0.04981729
    %v2331 = vmul.f32 %v2315, 0.04981729
    %v2332 = vadd.f32 %v2284, %v2316
    %v2333 = vadd.f32 %v2285, %v2317
    %v2334 = vadd.f32 %v2286, %v2318
    %v2335 = vadd.f32 %v2287, %v2319
    %v2336 = vadd.f32 %v2288, %v2320
    %v2337 = vadd.f32 %v2289, %v2321
    %v2338 = vadd.f32 %v2290, %v2322
    %v2339 = vadd.f32 %v2291, %v2323
    %v2340 = vadd.f32 %v2292, %v2324
    %v2341 = vadd.f32 %v2293, %v2325
    %v2342 = vadd.f32 %v2294, %v2326
    %v2343 = vadd.f32 %v2295, %v2327
    %v2344 = vadd.f32 %v2296, %v2328
    %v2345 = vadd.f32 %v2297, %v2329
    %v2346 = vadd.f32 %v2298, %v2330
    %v2347 = vadd.f32 %v2299, %v2331
    %v2348 = vld [vmem:[#allocation2 + $0x10] sm:$0xff]
    %v2349 = vld [vmem:[#allocation2 + $0x28] sm:$0xff]
    %v2350 = vld [vmem:[#allocation2 + $0x40] sm:$0xff]
    %v2351 = vld [vmem:[#allocation2 + $0x58] sm:$0xff]
    %v2352 = vld [vmem:[#allocation2 + $0x70] sm:$0xff]
    %v2353 = vld [vmem:[#allocation2 + $0x88] sm:$0xff]
    %v2354 = vld [vmem:[#allocation2 + $0xa0] sm:$0xff]
    %v2355 = vld [vmem:[#allocation2 + $0xb8] sm:$0xff]
    %v2356 = vmul.f32 %v2348, 0.014839454
    %v2357 = vmul.f32 %v2349, 0.014839454
    %v2358 = vmul.f32 %v2350, 0.014839454
    %v2359 = vmul.f32 %v2351, 0.014839454
    %v2360 = vmul.f32 %v2352, 0.014839454
    %v2361 = vmul.f32 %v2353, 0.014839454
    %v2362 = vmul.f32 %v2354, 0.014839454
    %v2363 = vmul.f32 %v2355, 0.014839454
    %v2364 = vadd.f32 %v2332, %v1981
    %v2365 = vadd.f32 %v2333, %v2356
    %v2366 = vadd.f32 %v2334, %v1983
    %v2367 = vadd.f32 %v2335, %v2357
    %v2368 = vadd.f32 %v2336, %v1985
    %v2369 = vadd.f32 %v2337, %v2358
    %v2370 = vadd.f32 %v2338, %v1987
    %v2371 = vadd.f32 %v2339, %v2359
    %v2372 = vadd.f32 %v2340, %v1989
    %v2373 = vadd.f32 %v2341, %v2360
    %v2374 = vadd.f32 %v2342, %v1991
    %v2375 = vadd.f32 %v2343, %v2361
    %v2376 = vadd.f32 %v2344, %v1993
    %v2377 = vadd.f32 %v2345, %v2362
    %v2378 = vadd.f32 %v2346, %v1995
    %v2379 = vadd.f32 %v2347, %v2363
    %v2380 = vadd.f32 %v2364, 1.0
    %v2381 = vadd.f32 %v2365, 1.0
    %v2382 = vadd.f32 %v2366, 1.0
    %v2383 = vadd.f32 %v2367, 1.0
    %v2384 = vadd.f32 %v2368, 1.0
    %v2385 = vadd.f32 %v2369, 1.0
    %v2386 = vadd.f32 %v2370, 1.0
    %v2387 = vadd.f32 %v2371, 1.0
    %v2388 = vadd.f32 %v2372, 1.0
    %v2389 = vadd.f32 %v2373, 1.0
    %v2390 = vadd.f32 %v2374, 1.0
    %v2391 = vadd.f32 %v2375, 1.0
    %v2392 = vadd.f32 %v2376, 1.0
    %v2393 = vadd.f32 %v2377, 1.0
    %v2394 = vadd.f32 %v2378, 1.0
    %v2395 = vadd.f32 %v2379, 1.0
    %v2396 = vlog2.pop %v44
    %v2397 = vmul.f32 %v2396, 0.6931472
    %v2398 = vlog2.pop %v45
    %v2399 = vmul.f32 %v2398, 0.6931472
    %v2400 = vlog2.pop %v46
    %v2401 = vmul.f32 %v2400, 0.6931472
    %v2402 = vlog2.pop %v47
    %v2403 = vmul.f32 %v2402, 0.6931472
    %v2404 = vlog2.pop %v48
    %v2405 = vmul.f32 %v2404, 0.6931472
    %v2406 = vlog2.pop %v49
    %v2407 = vmul.f32 %v2406, 0.6931472
    %v2408 = vlog2.pop %v50
    %v2409 = vmul.f32 %v2408, 0.6931472
    %v2410 = vlog2.pop %v51
    %v2411 = vmul.f32 %v2410, 0.6931472
    %v2412 = vlog2.pop %v52
    %v2413 = vmul.f32 %v2412, 0.6931472
    %v2414 = vlog2.pop %v53
    %v2415 = vmul.f32 %v2414, 0.6931472
    %v2416 = vlog2.pop %v54
    %v2417 = vmul.f32 %v2416, 0.6931472
    %v2418 = vlog2.pop %v55
    %v2419 = vmul.f32 %v2418, 0.6931472
    %v2420 = vlog2.pop %v56
    %v2421 = vmul.f32 %v2420, 0.6931472
    %v2422 = vlog2.pop %v57
    %v2423 = vmul.f32 %v2422, 0.6931472
    %v2424 = vlog2.pop %v58
    %v2425 = vmul.f32 %v2424, 0.6931472
    %v2426 = vlog2.pop %v59
    %v2427 = vmul.f32 %v2426, 0.6931472
    %v2428 = vmax.f32 %v2397, -100.0
    %v2429 = vmax.f32 %v2399, -100.0
    %v2430 = vmax.f32 %v2401, -100.0
    %v2431 = vmax.f32 %v2403, -100.0
    %v2432 = vmax.f32 %v2405, -100.0
    %v2433 = vmax.f32 %v2407, -100.0
    %v2434 = vmax.f32 %v2409, -100.0
    %v2435 = vmax.f32 %v2411, -100.0
    %v2436 = vmax.f32 %v2413, -100.0
    %v2437 = vmax.f32 %v2415, -100.0
    %v2438 = vmax.f32 %v2417, -100.0
    %v2439 = vmax.f32 %v2419, -100.0
    %v2440 = vmax.f32 %v2421, -100.0
    %v2441 = vmax.f32 %v2423, -100.0
    %v2442 = vmax.f32 %v2425, -100.0
    %v2443 = vmax.f32 %v2427, -100.0
    %v2444 = vsub.f32 1.0, %v44
    %v2445 = vsub.f32 1.0, %v45
    %v2446 = vsub.f32 1.0, %v46
    %v2447 = vsub.f32 1.0, %v47
    %v2448 = vsub.f32 1.0, %v48
    %v2449 = vsub.f32 1.0, %v49
    %v2450 = vsub.f32 1.0, %v50
    %v2451 = vsub.f32 1.0, %v51
    %v2452 = vsub.f32 1.0, %v52
    %v2453 = vsub.f32 1.0, %v53
    %v2454 = vsub.f32 1.0, %v54
    %v2455 = vsub.f32 1.0, %v55
    %v2456 = vsub.f32 1.0, %v56
    %v2457 = vsub.f32 1.0, %v57
    %v2458 = vsub.f32 1.0, %v58
    %v2459 = vsub.f32 1.0, %v59
    %v2460 = vlog2.pop %v2444
    %v2461 = vmul.f32 %v2460, 0.6931472
    %v2462 = vlog2.pop %v2445
    %v2463 = vmul.f32 %v2462, 0.6931472
    %v2464 = vlog2.pop %v2446
    %v2465 = vmul.f32 %v2464, 0.6931472
    %v2466 = vlog2.pop %v2447
    %v2467 = vmul.f32 %v2466, 0.6931472
    %v2468 = vlog2.pop %v2448
    %v2469 = vmul.f32 %v2468, 0.6931472
    %v2470 = vlog2.pop %v2449
    %v2471 = vmul.f32 %v2470, 0.6931472
    %v2472 = vlog2.pop %v2450
    %v2473 = vmul.f32 %v2472, 0.6931472
    %v2474 = vlog2.pop %v2451
    %v2475 = vmul.f32 %v2474, 0.6931472
    %v2476 = vlog2.pop %v2452
    %v2477 = vmul.f32 %v2476, 0.6931472
    %v2478 = vlog2.pop %v2453
    %v2479 = vmul.f32 %v2478, 0.6931472
    %v2480 = vlog2.pop %v2454
    %v2481 = vmul.f32 %v2480, 0.6931472
    %v2482 = vlog2.pop %v2455
    %v2483 = vmul.f32 %v2482, 0.6931472
    %v2484 = vlog2.pop %v2456
    %v2485 = vmul.f32 %v2484, 0.6931472
    %v2486 = vlog2.pop %v2457
    %v2487 = vmul.f32 %v2486, 0.6931472
    %v2488 = vlog2.pop %v2458
    %v2489 = vmul.f32 %v2488, 0.6931472
    %v2490 = vlog2.pop %v2459
    %v2491 = vmul.f32 %v2490, 0.6931472
    %v2492 = vmax.f32 %v2461, -100.0
    %v2493 = vmax.f32 %v2463, -100.0
    %v2494 = vmax.f32 %v2465, -100.0
    %v2495 = vmax.f32 %v2467, -100.0
    %v2496 = vmax.f32 %v2469, -100.0
    %v2497 = vmax.f32 %v2471, -100.0
    %v2498 = vmax.f32 %v2473, -100.0
    %v2499 = vmax.f32 %v2475, -100.0
    %v2500 = vmax.f32 %v2477, -100.0
    %v2501 = vmax.f32 %v2479, -100.0
    %v2502 = vmax.f32 %v2481, -100.0
    %v2503 = vmax.f32 %v2483, -100.0
    %v2504 = vmax.f32 %v2485, -100.0
    %v2505 = vmax.f32 %v2487, -100.0
    %v2506 = vmax.f32 %v2489, -100.0
    %v2507 = vmax.f32 %v2491, -100.0
    %v2508 = vmul.f32 %v60, %v2428
    %v2509 = vmul.f32 %v61, %v2429
    %v2510 = vmul.f32 %v62, %v2430
    %v2511 = vmul.f32 %v63, %v2431
    %v2512 = vmul.f32 %v64, %v2432
    %v2513 = vmul.f32 %v65, %v2433
    %v2514 = vmul.f32 %v66, %v2434
    %v2515 = vmul.f32 %v67, %v2435
    %v2516 = vmul.f32 %v68, %v2436
    %v2517 = vmul.f32 %v69, %v2437
    %v2518 = vmul.f32 %v70, %v2438
    %v2519 = vmul.f32 %v71, %v2439
    %v2520 = vmul.f32 %v72, %v2440
    %v2521 = vmul.f32 %v73, %v2441
    %v2522 = vmul.f32 %v74, %v2442
    %v2523 = vmul.f32 %v75, %v2443
    %v2524 = vmul.f32 %v76, %v2492
    %v2525 = vmul.f32 %v77, %v2493
    %v2526 = vmul.f32 %v78, %v2494
    %v2527 = vmul.f32 %v79, %v2495
    %v2528 = vmul.f32 %v80, %v2496
    %v2529 = vmul.f32 %v81, %v2497
    %v2530 = vmul.f32 %v82, %v2498
    %v2531 = vmul.f32 %v83, %v2499
    %v2532 = vmul.f32 %v84, %v2500
    %v2533 = vmul.f32 %v85, %v2501
    %v2534 = vmul.f32 %v86, %v2502
    %v2535 = vmul.f32 %v87, %v2503
    %v2536 = vmul.f32 %v88, %v2504
    %v2537 = vmul.f32 %v89, %v2505
    %v2538 = vmul.f32 %v90, %v2506
    %v2539 = vmul.f32 %v91, %v2507
    %v2540 = vadd.f32 %v2508, %v2524
    %v2541 = vadd.f32 %v2509, %v2525
    %v2542 = vadd.f32 %v2510, %v2526
    %v2543 = vadd.f32 %v2511, %v2527
    %v2544 = vadd.f32 %v2512, %v2528
    %v2545 = vadd.f32 %v2513, %v2529
    %v2546 = vadd.f32 %v2514, %v2530
    %v2547 = vadd.f32 %v2515, %v2531
    %v2548 = vadd.f32 %v2516, %v2532
    %v2549 = vadd.f32 %v2517, %v2533
    %v2550 = vadd.f32 %v2518, %v2534
    %v2551 = vadd.f32 %v2519, %v2535
    %v2552 = vadd.f32 %v2520, %v2536
    %v2553 = vadd.f32 %v2521, %v2537
    %v2554 = vadd.f32 %v2522, %v2538
    %v2555 = vadd.f32 %v2523, %v2539
    %v2556 = vsub.f32 0.0, %v2540
    %v2557 = vsub.f32 0.0, %v2541
    %v2558 = vsub.f32 0.0, %v2542
    %v2559 = vsub.f32 0.0, %v2543
    %v2560 = vsub.f32 0.0, %v2544
    %v2561 = vsub.f32 0.0, %v2545
    %v2562 = vsub.f32 0.0, %v2546
    %v2563 = vsub.f32 0.0, %v2547
    %v2564 = vsub.f32 0.0, %v2548
    %v2565 = vsub.f32 0.0, %v2549
    %v2566 = vsub.f32 0.0, %v2550
    %v2567 = vsub.f32 0.0, %v2551
    %v2568 = vsub.f32 0.0, %v2552
    %v2569 = vsub.f32 0.0, %v2553
    %v2570 = vsub.f32 0.0, %v2554
    %v2571 = vsub.f32 0.0, %v2555
    %2588 = vrot.lane.b32.xlu0 %v2380, 124
    %v2589 = vpop.permute.xlu0 %2588
    %2590 = vrot.lane.b32.xlu0 %v2381, 124
    %v2591 = vpop.permute.xlu0 %2590
    %2592 = vrot.lane.b32.xlu0 %v2382, 124
    %v2593 = vpop.permute.xlu0 %2592
    %2594 = vrot.lane.b32.xlu0 %v2383, 124
    %v2595 = vpop.permute.xlu0 %2594
    %2596 = vrot.lane.b32.xlu0 %v2384, 124
    %v2597 = vpop.permute.xlu0 %2596
    %2598 = vrot.lane.b32.xlu0 %v2385, 124
    %v2599 = vpop.permute.xlu0 %2598
    %2600 = vrot.lane.b32.xlu0 %v2386, 124
    %v2601 = vpop.permute.xlu0 %2600
    %2602 = vrot.lane.b32.xlu0 %v2387, 124
    %v2603 = vpop.permute.xlu0 %2602
    %2604 = vrot.lane.b32.xlu0 %v2388, 124
    %v2605 = vpop.permute.xlu0 %2604
    %2606 = vrot.lane.b32.xlu0 %v2389, 124
    %v2607 = vpop.permute.xlu0 %2606
    %2608 = vrot.lane.b32.xlu0 %v2390, 124
    %v2609 = vpop.permute.xlu0 %2608
    %2610 = vrot.lane.b32.xlu0 %v2391, 124
    %v2611 = vpop.permute.xlu0 %2610
    %2612 = vrot.lane.b32.xlu0 %v2392, 124
    %v2613 = vpop.permute.xlu0 %2612
    %2614 = vrot.lane.b32.xlu0 %v2393, 124
    %v2615 = vpop.permute.xlu0 %2614
    %2616 = vrot.lane.b32.xlu0 %v2394, 124
    %v2617 = vpop.permute.xlu0 %2616
    %2618 = vrot.lane.b32.xlu0 %v2395, 124
    %v2619 = vpop.permute.xlu0 %2618
    %v2636 = vmul.f32 %v2556, %v2589
    %v2637 = vmul.f32 %v2557, %v2591
    %v2638 = vmul.f32 %v2558, %v2593
    %v2639 = vmul.f32 %v2559, %v2595
    %v2640 = vmul.f32 %v2560, %v2597
    %v2641 = vmul.f32 %v2561, %v2599
    %v2642 = vmul.f32 %v2562, %v2601
    %v2643 = vmul.f32 %v2563, %v2603
    %v2644 = vmul.f32 %v2564, %v2605
    %v2645 = vmul.f32 %v2565, %v2607
    %v2646 = vmul.f32 %v2566, %v2609
    %v2647 = vmul.f32 %v2567, %v2611
    %v2648 = vmul.f32 %v2568, %v2613
    %v2649 = vmul.f32 %v2569, %v2615
    %v2650 = vmul.f32 %v2570, %v2617
    %v2651 = vmul.f32 %v2571, %v2619
    %vm2652 = vcmask 130048
    %v2653 = vsel %vm2652, %v2636, 0.0
    %v2654 = vsel %vm2652, %v2637, 0.0
    %v2655 = vadd.f32 %v2653, %v2654
    %v2656 = vsel %vm2652, %v2638, 0.0
    %v2657 = vadd.f32 %v2655, %v2656
    %v2658 = vsel %vm2652, %v2639, 0.0
    %v2659 = vadd.f32 %v2657, %v2658
    %v2660 = vsel %vm2652, %v2640, 0.0
    %v2661 = vadd.f32 %v2659, %v2660
    %v2662 = vsel %vm2652, %v2641, 0.0
    %v2663 = vadd.f32 %v2661, %v2662
    %v2664 = vsel %vm2652, %v2642, 0.0
    %v2665 = vadd.f32 %v2663, %v2664
    %v2666 = vsel %vm2652, %v2643, 0.0
    %v2667 = vadd.f32 %v2665, %v2666
    %v2668 = vsel %vm2652, %v2644, 0.0
    %v2669 = vadd.f32 %v2667, %v2668
    %v2670 = vsel %vm2652, %v2645, 0.0
    %v2671 = vadd.f32 %v2669, %v2670
    %v2672 = vsel %vm2652, %v2646, 0.0
    %v2673 = vadd.f32 %v2671, %v2672
    %v2674 = vsel %vm2652, %v2647, 0.0
    %v2675 = vadd.f32 %v2673, %v2674
    %v2676 = vsel %vm2652, %v2648, 0.0
    %v2677 = vadd.f32 %v2675, %v2676
    %v2678 = vsel %vm2652, %v2649, 0.0
    %v2679 = vadd.f32 %v2677, %v2678
    %v2680 = vsel %vm2652, %v2650, 0.0
    %v2681 = vadd.f32 %v2679, %v2680
    %v2682 = vsel %vm2652, %v2651, 0.0
    %v2683 = vadd.f32 %v2681, %v2682
    %2684 = vadd.xlane.f32.xlu0 %v2683
    %v2685 = vpop.xlane.xlu0 %2684
    %v2686 = vrot.slane %v2685, 4
    %v2687 = vadd.f32 %v2685, %v2686
    %v2688 = vrot.slane %v2687, 2
    %v2689 = vadd.f32 %v2687, %v2688
    %v2690 = vrot.slane %v2689, 1
    %v2691 = vadd.f32 %v2689, %v2690
    %s2692 = vtos %v2691
    %v2693 = vstv %s2692
    %vm2694 = vcmask 0
    %2695 = vst.msk [vmem:[#allocation8] sm:$0x1] %vm2694, %v2693
    // Predicated region
    $region18: #{tpu_custom_call.1} parent=1 // pred_check
      _
    $region19: #{tpu_custom_call.1} parent=1 // pred_check_branch
      %2697 = sbr.rel (0) target = $region21
    $region20: #{tpu_custom_call.1} parent=1 // pred_region
      %2699 = vsyncadd [#allocation5], 0
      %s2701 = sshll.u32 [#allocation8], 4
      %s2702 = int_to_ptr.vmem [resolvable:$true] %s2701
      %s2703 = sshll.u32 %s2, 4
      %s2704 = int_to_ptr.hbm [resolvable:$true] %s2703
      %2706 = dma.vmem_to_hbm [thread:$0]  %s2702, 16, %s2704, [#allocation5]
    $region21: #{tpu_custom_call.1} parent=1 // pred_fallthru
      _
    // Predicated region
    $region22: #{tpu_custom_call.1} parent=1 // pred_check
      _
    $region23: #{tpu_custom_call.1} parent=1 // pred_check_branch
      %2708 = sbr.rel (0) target = $region25
    $region24: #{tpu_custom_call.1} parent=1 // pred_region
      %2710 = dma.done [#allocation5], 16
    $region25: #{tpu_custom_call.1} parent=1 // pred_fallthru
      _
    %2711 = vsyncpa [#allocation4], 1
    %2712 = vsyncpa [#allocation7], 1
    %2713 = vsyncpa [#allocation5], 1

</llo_original>
